<compile_context>
chip_gen: v7x
topology: tpu7x:2x2x1
jax: 0.10.0
libtpu: 0.0.40
codegen_flags: <defaults>
</compile_context>

<pallas_src>
import functools

import jax
import jax.numpy as jnp
import numpy as np
from jax import lax
from jax.experimental import pallas as pl
from jax.experimental.pallas import tpu as pltpu


def _round_up(v, m):
    return ((v + m - 1) // m) * m


def _ccnn_matmul_kernel(p_ref, w_ref, o_ref):
    # One block-complex, M-packed matmul: bf16 operands, f32 MXU accumulation,
    # lane-dense f32 store (every output byte is useful data).
    o_ref[...] = jnp.dot(p_ref[...], w_ref[...],
                         preferred_element_type=jnp.float32)


def _vmem_budget_bytes():
    """(working budget, vmem_limit cap) per TPU generation."""
    try:
        cap = int(pltpu.get_tpu_info().vmem_capacity_bytes)
    except Exception:  # conservative fallback if the query is unavailable
        cap = 64 * 1024 * 1024
    if cap >= 100 * 1024 * 1024:          # v5e / v6e: 128 MiB physical
        return cap // 2, cap * 3 // 4
    return cap * 3 // 8, cap // 2         # v7x: 64 MiB physical per TC


def ccnn_forward(x, w_real, w_imag, stride, padding, tm=1024):
    """Complex Conv3d forward: x complex64 [N, Cin, D, H, W] ->
    complex64 [N, Cout, Do, Ho, Wo] (same semantics as the PyTorch CCNN,
    bias=False)."""
    n, c_in, d, h, w = x.shape
    c_out = w_real.shape[0]
    kd, kh, kw = w_real.shape[2:]
    sd, sh, sw = stride
    pd, ph, pw = padding

    c2 = 2 * c_in                        # [real | imag] channels
    n_taps = kd * kh * kw
    k2 = n_taps * c2                     # reduction size, K order = (kd,kh,kw,ch2)
    nsm = 2 * c_out                      # [real out | imag out]

    do = (d + 2 * pd - kd) // sd + 1
    ho = (h + 2 * ph - kh) // sh + 1
    wo = (w + 2 * pw - kw) // sw + 1
    m = n * do * ho * wo

    budget, vmem_cap = _vmem_budget_bytes()

    # ---- M-packing factor: `pack` consecutive output rows share one 128-lane
    # output row via a block-diagonal weight -> zero-waste, unmasked stores.
    kpad = _round_up(k2, 128)
    pack = max(1, min(8, 128 // nsm)) if nsm <= 128 else 1
    while pack > 1 and 2 * (pack * kpad) * (pack * nsm) * 2 > budget // 3:
        pack //= 2                       # keep the resident W out of VMEM trouble
    nl = pack * nsm                      # output lane width (128 when it divides)

    # ---- tile size: big tiles when M is large, but aim for >= ~8 evenly
    # split grid steps so v7x's two TensorCores each get pipelined work.
    row_quant = 16 * pack                # bf16 sublane quantum after packing
    tm = max(row_quant,
             min(int(tm), _round_up(max(m // 8, 1), row_quant)))
    tm = _round_up(tm, row_quant)

    def _vmem_need(t):
        return (2 * (t // pack) * (pack * kpad) * 2    # P tiles, bf16, 2 buffers
                + 2 * (pack * kpad) * nl * 2           # resident W, bf16, 2 buffers
                + 2 * (t // pack) * nl * 4)            # out tiles, f32, 2 buffers

    while tm > row_quant and _vmem_need(tm) > budget:
        tm = _round_up(tm // 2, row_quant)
    vmem_limit = int(min(max(2 * _vmem_need(tm), 32 * 1024 * 1024), vmem_cap))

    m_pad = _round_up(max(m, tm), tm)
    if (m_pad // tm) > 1 and (m_pad // tm) % 2 == 1:
        m_pad += tm                      # even step count across v7x's 2 TCs

    # ---- patch matrix, built directly in bf16 in its kernel K-layout --------
    # (cast BEFORE the tap gather; K zero-padding folded into the same concat;
    #  no separate f32->bf16 pad+cast pass over the tap-expanded matrix).
    x_cat = jnp.concatenate(
        [jnp.real(x).astype(jnp.bfloat16), jnp.imag(x).astype(jnp.bfloat16)],
        axis=1)                                           # [N, 2Cin, D, H, W]
    x_cl = jnp.transpose(x_cat, (0, 2, 3, 4, 1))          # channel-last (small)
    x_cl = jnp.pad(x_cl, ((0, 0), (pd, pd), (ph, ph), (pw, pw), (0, 0)))
    slabs = []
    for i in range(kd):
        for j in range(kh):
            for l in range(kw):
                slabs.append(x_cl[:, i:i + sd * do:sd, j:j + sh * ho:sh,
                                  l:l + sw * wo:sw, :])
    if kpad > k2:
        slabs.append(jnp.zeros((n, do, ho, wo, kpad - k2), jnp.bfloat16))
    p_cat = jnp.concatenate(slabs, axis=-1).reshape(m, kpad)
    p_cat = jnp.pad(p_cat, ((0, m_pad - m), (0, 0)))
    p_packed = p_cat.reshape(m_pad // pack, pack * kpad)   # free row-major view

    # ---- block-complex weights, K order (kd, kh, kw, ch2), block-diag packed
    rows_r = jnp.concatenate([w_real, w_imag], axis=0)     # real-part channels
    rows_i = jnp.concatenate([-w_imag, w_real], axis=0)    # imag-part channels
    w_cat = jnp.concatenate(
        [jnp.transpose(rows_r, (2, 3, 4, 1, 0)),
         jnp.transpose(rows_i, (2, 3, 4, 1, 0))], axis=3)  # [kd,kh,kw,2Cin,2Cout]
    w_cat = w_cat.reshape(k2, nsm).astype(jnp.float32)
    w_cat = jnp.pad(w_cat, ((0, kpad - k2), (0, 0)))       # [kpad, 2Cout]
    w_blk = jnp.kron(jnp.eye(pack, dtype=jnp.float32),
                     w_cat).astype(jnp.bfloat16)           # [pack*kpad, pack*2Cout]

    grid = (m_pad // tm,)
    flops = 2 * (m_pad // pack) * (pack * kpad) * nl
    bytes_accessed = (p_packed.size * 2 + w_blk.size * 2
                      + (m_pad // pack) * nl * 4)

    out = pl.pallas_call(
        _ccnn_matmul_kernel,
        out_shape=jax.ShapeDtypeStruct((m_pad // pack, nl), jnp.float32),
        grid_spec=pltpu.PrefetchScalarGridSpec(
            num_scalar_prefetch=0,
            grid=grid,
            in_specs=[
                pl.BlockSpec((tm // pack, pack * kpad), lambda i: (i, 0)),
                pl.BlockSpec((pack * kpad, nl), lambda i: (0, 0)),  # resident W
            ],
            out_specs=pl.BlockSpec((tm // pack, nl), lambda i: (i, 0)),
        ),
        compiler_params=pltpu.CompilerParams(
            dimension_semantics=("parallel",),   # M sharded across v7x's 2 TCs
            vmem_limit_bytes=vmem_limit),
        cost_estimate=pl.CostEstimate(
            flops=int(flops), transcendentals=0,
            bytes_accessed=int(bytes_accessed)),
    )(p_packed, w_blk)

    # Unpack: packed row r, cols [j*nsm:(j+1)*nsm) == result for M-row r*pack+j.
    out = out.reshape(m_pad, nsm)[:m]
    # NOTE: the final transpose back to NCDHW only matches the PyTorch layout.
    out_r = out[:, :c_out].reshape(n, do, ho, wo, c_out).transpose(0, 4, 1, 2, 3)
    out_i = out[:, c_out:].reshape(n, do, ho, wo, c_out).transpose(0, 4, 1, 2, 3)
    return lax.complex(out_r, out_i)


def _conv3d_ref(x, w, stride, padding):
    return lax.conv_general_dilated(
        x, w, window_strides=stride,
        padding=[(p, p) for p in padding],
        dimension_numbers=("NCDHW", "OIDHW", "NCDHW"))


if __name__ == "__main__":
    key = jax.random.PRNGKey(0)
    kx1, kx2, kx3, kx4 = jax.random.split(key, 4)

    # Small shapes consistent with the module: Conv3d(4 -> 8, k=3, s=1, p=1).
    N, Cin, Cout = 2, 4, 8
    D = H = W = 8
    ks, s, p = 3, 1, 1

    x_real = jax.random.normal(kx1, (N, Cin, D, H, W), jnp.float32)
    x_imag = jax.random.normal(kx2, (N, Cin, D, H, W), jnp.float32)
    x = lax.complex(x_real, x_imag)

    # Deterministic weight init (matches PyTorch Conv3d kaiming-uniform bounds).
    fan_in = Cin * ks * ks * ks
    bound = float(1.0 / np.sqrt(fan_in))
    w_real = jax.random.uniform(kx3, (Cout, Cin, ks, ks, ks), jnp.float32,
                                -bound, bound)
    w_imag = jax.random.uniform(kx4, (Cout, Cin, ks, ks, ks), jnp.float32,
                                -bound, bound)

    fwd = jax.jit(functools.partial(ccnn_forward, tm=1024),
                  static_argnums=(3, 4))
    out = fwd(x, w_real, w_imag, (s, s, s), (p, p, p))
    out = jax.block_until_ready(out)

    # Reference check against XLA conv (complex conv rule).  bf16 MXU inputs
    # with f32 accumulation -> slightly loosened tolerances vs all-f32.
    ref_real = _conv3d_ref(x_real, w_real, (s, s, s), (p, p, p)) \
        - _conv3d_ref(x_imag, w_imag, (s, s, s), (p, p, p))
    ref_imag = _conv3d_ref(x_real, w_imag, (s, s, s), (p, p, p)) \
        + _conv3d_ref(x_imag, w_real, (s, s, s), (p, p, p))
    np.testing.assert_allclose(np.asarray(jnp.real(out)), np.asarray(ref_real),
                               rtol=3e-2, atol=3e-2)
    np.testing.assert_allclose(np.asarray(jnp.imag(out)), np.asarray(ref_imag),
                               rtol=3e-2, atol=3e-2)

    print("KERNEL_OK")
</pallas_src>

<mosaic_0001>
module attributes {stable_mosaic.version = 11 : i64} {
  func.func @_ccnn_matmul_kernel(%arg0: i32, %arg1: memref<16x2048xbf16, #tpu.memory_space<vmem>>, %arg2: memref<2048x128xbf16, #tpu.memory_space<vmem>>, %arg3: memref<16x128xf32, #tpu.memory_space<vmem>>) attributes {dimension_semantics = [#tpu.dimension_semantics<parallel>], iteration_bounds = array<i64: 8>, scalar_prefetch = 0 : i64, scratch_operands = 0 : i64, tpu.core_type = #tpu.core_type<tc>, window_params = [{transform_indices = @transform_0, window_bounds = array<i64: 16, 2048>}, {pipeline_mode = #tpu.pipeline_mode<synchronous>, transform_indices = @transform_1, window_bounds = array<i64: 2048, 128>}, {transform_indices = @transform_2, window_bounds = array<i64: 16, 128>}]} {
    %c0 = arith.constant 0 : index
    %c0_0 = arith.constant 0 : index
    %0 = vector.load %arg1[%c0, %c0_0] : memref<16x2048xbf16, #tpu.memory_space<vmem>>, vector<16x2048xbf16>
    %c0_1 = arith.constant 0 : index
    %c0_2 = arith.constant 0 : index
    %1 = vector.load %arg2[%c0_1, %c0_2] : memref<2048x128xbf16, #tpu.memory_space<vmem>>, vector<2048x128xbf16>
    %cst = arith.constant dense<0.000000e+00> : vector<16x128xf32>
    %2 = tpu.matmul %0, %1, %cst {dimension_numbers = #tpu.dot_dimension_numbers<[1], [0], [0], [1], [0, 0, 1, 1], [], []>} : vector<16x2048xbf16>, vector<2048x128xbf16>, vector<16x128xf32> -> vector<16x128xf32>
    %c0_3 = arith.constant 0 : index
    %c0_4 = arith.constant 0 : index
    %3 = vector.load %arg3[%c0_3, %c0_4] : memref<16x128xf32, #tpu.memory_space<vmem>>, vector<16x128xf32>
    tpu.vector_store %arg3[%c0_3, %c0_4], %2 {strides = array<i32>} : memref<16x128xf32, #tpu.memory_space<vmem>>, vector<16x128xf32>,
    return
  }
  func.func @transform_0(%arg0: i32) -> (i32, i32) {
    %c0_i32 = arith.constant 0 : i32
    %c0_i32_0 = arith.constant 0 : i32
    return %arg0, %c0_i32 : i32, i32
  }
  func.func @transform_1(%arg0: i32) -> (i32, i32) {
    %c0_i32 = arith.constant 0 : i32
    %c0_i32_0 = arith.constant 0 : i32
    %c0_i32_1 = arith.constant 0 : i32
    return %c0_i32, %c0_i32_0 : i32, i32
  }
  func.func @transform_2(%arg0: i32) -> (i32, i32) {
    %c0_i32 = arith.constant 0 : i32
    %c0_i32_0 = arith.constant 0 : i32
    return %arg0, %c0_i32 : i32, i32
  }
}

</mosaic_0001>

<llo_original>
// kernel: custom-call
$region0: #{custom-call}
  %s0 = inlined_call_operand.hbm [shape: c64[2,4,8,8,8], index: 0, kind: input, shape index: {}]
  %s1 = inlined_call_operand.vmem [shape: f32[2,4,8,8,8], index: 1, kind: output, shape index: {}]
  $region1: #{custom-call} parent=0
    #allocation0 [shape = 's32[1]{0}', space=sflag, size = 0x4, scoped, tag = 'scoped memory for custom-call']
    %2 = vsyncpa [#allocation0], 0
    %s3 = sshll.u32 %s1, 4
    %s4 = int_to_ptr.vmem [resolvable:$true] %s3
    %6 = dma.hbm_to_vmem [thread:$0]  %s0, 8192, %s4, [#allocation0]
    %7 = dma.done [#allocation0], 8192
    %8 = vsyncpa [#allocation0], 1

// kernel: custom-call.1
$region0: #{custom-call.1}
  %s0 = inlined_call_operand.hbm [shape: c64[2,4,8,8,8], index: 0, kind: input, shape index: {}]
  %s1 = inlined_call_operand.vmem [shape: f32[2,4,8,8,8], index: 1, kind: output, shape index: {}]
  %s2 = scalar_lea.hbm %s0, 8192
  $region1: #{custom-call.1} parent=0
    #allocation0 [shape = 's32[1]{0}', space=sflag, size = 0x4, scoped, tag = 'scoped memory for custom-call.1']
    %3 = vsyncpa [#allocation0], 0
    %s4 = sshll.u32 %s1, 4
    %s5 = int_to_ptr.vmem [resolvable:$true] %s4
    %7 = dma.hbm_to_vmem [thread:$0]  %s2, 8192, %s5, [#allocation0]
    %8 = dma.done [#allocation0], 8192
    %9 = vsyncpa [#allocation0], 1

// kernel: neg.1
$region0: #{neg.1}
  #allocation0 [shape = 's32[1]{0}', space=sflag, size = 0x4, scoped, tag = 'scoped memory for neg.1']
  %s0 = inlined_call_operand.vmem [shape: f32[8,4,3,3,3], index: 0, kind: input, shape index: {}]
  %s1 = inlined_call_operand.vmem [shape: f32[8,4,3,3,3], index: 1, kind: output, shape index: {}]
  %v2 = vld [vmem:[%s0] sm:$0xf]
  %3 = xla_tuple %v2
  %4 = xla_tuple %3
  %v5 = vxor.u32 %v2, 2147483648
  %6 = xla_tuple %v5
  %7 = vst [vmem:[%s1] sm:$0xf] %v5
  %s8 = scalar_lea.vmem %s0, 36
  %v9 = vld [vmem:[%s8] sm:$0xf]
  %10 = xla_tuple %v9
  %11 = xla_tuple %10
  %v12 = vxor.u32 %v9, 2147483648
  %13 = xla_tuple %v12
  %s14 = scalar_lea.vmem %s1, 36
  %15 = vst [vmem:[%s14] sm:$0xf] %v12
  %s16 = scalar_lea.vmem %s0, 72
  %v17 = vld [vmem:[%s16] sm:$0xf]
  %18 = xla_tuple %v17
  %19 = xla_tuple %18
  %v20 = vxor.u32 %v17, 2147483648
  %21 = xla_tuple %v20
  %s22 = scalar_lea.vmem %s1, 72
  %23 = vst [vmem:[%s22] sm:$0xf] %v20
  %s24 = scalar_lea.vmem %s0, 12
  %v25 = vld [vmem:[%s24] sm:$0xf]
  %26 = xla_tuple %v25
  %27 = xla_tuple %26
  %v28 = vxor.u32 %v25, 2147483648
  %29 = xla_tuple %v28
  %s30 = scalar_lea.vmem %s1, 12
  %31 = vst [vmem:[%s30] sm:$0xf] %v28
  %s32 = scalar_lea.vmem %s0, 48
  %v33 = vld [vmem:[%s32] sm:$0xf]
  %34 = xla_tuple %v33
  %35 = xla_tuple %34
  %v36 = vxor.u32 %v33, 2147483648
  %37 = xla_tuple %v36
  %s38 = scalar_lea.vmem %s1, 48
  %39 = vst [vmem:[%s38] sm:$0xf] %v36
  %s40 = scalar_lea.vmem %s0, 84
  %v41 = vld [vmem:[%s40] sm:$0xf]
  %42 = xla_tuple %v41
  %43 = xla_tuple %42
  %v44 = vxor.u32 %v41, 2147483648
  %45 = xla_tuple %v44
  %s46 = scalar_lea.vmem %s1, 84
  %47 = vst [vmem:[%s46] sm:$0xf] %v44
  %s48 = scalar_lea.vmem %s0, 24
  %v49 = vld [vmem:[%s48] sm:$0xf]
  %50 = xla_tuple %v49
  %51 = xla_tuple %50
  %v52 = vxor.u32 %v49, 2147483648
  %53 = xla_tuple %v52
  %s54 = scalar_lea.vmem %s1, 24
  %55 = vst [vmem:[%s54] sm:$0xf] %v52
  %s56 = scalar_lea.vmem %s0, 60
  %v57 = vld [vmem:[%s56] sm:$0xf]
  %58 = xla_tuple %v57
  %59 = xla_tuple %58
  %v60 = vxor.u32 %v57, 2147483648
  %61 = xla_tuple %v60
  %s62 = scalar_lea.vmem %s1, 60
  %63 = vst [vmem:[%s62] sm:$0xf] %v60
  %s64 = scalar_lea.vmem %s0, 96
  %v65 = vld [vmem:[%s64] sm:$0xf]
  %66 = xla_tuple %v65
  %67 = xla_tuple %66
  %v68 = vxor.u32 %v65, 2147483648
  %69 = xla_tuple %v68
  %s70 = scalar_lea.vmem %s1, 96
  %71 = vst [vmem:[%s70] sm:$0xf] %v68
  %s72 = scalar_lea.vmem %s0, 4
  %v73 = vld [vmem:[%s72] sm:$0xf]
  %74 = xla_tuple %v73
  %75 = xla_tuple %74
  %v76 = vxor.u32 %v73, 2147483648
  %77 = xla_tuple %v76
  %s78 = scalar_lea.vmem %s1, 4
  %79 = vst [vmem:[%s78] sm:$0xf] %v76
  %s80 = scalar_lea.vmem %s0, 40
  %v81 = vld [vmem:[%s80] sm:$0xf]
  %82 = xla_tuple %v81
  %83 = xla_tuple %82
  %v84 = vxor.u32 %v81, 2147483648
  %85 = xla_tuple %v84
  %s86 = scalar_lea.vmem %s1, 40
  %87 = vst [vmem:[%s86] sm:$0xf] %v84
  %s88 = scalar_lea.vmem %s0, 76
  %v89 = vld [vmem:[%s88] sm:$0xf]
  %90 = xla_tuple %v89
  %91 = xla_tuple %90
  %v92 = vxor.u32 %v89, 2147483648
  %93 = xla_tuple %v92
  %s94 = scalar_lea.vmem %s1, 76
  %95 = vst [vmem:[%s94] sm:$0xf] %v92
  %s96 = scalar_lea.vmem %s0, 16
  %v97 = vld [vmem:[%s96] sm:$0xf]
  %98 = xla_tuple %v97
  %99 = xla_tuple %98
  %v100 = vxor.u32 %v97, 2147483648
  %101 = xla_tuple %v100
  %s102 = scalar_lea.vmem %s1, 16
  %103 = vst [vmem:[%s102] sm:$0xf] %v100
  %s104 = scalar_lea.vmem %s0, 52
  %v105 = vld [vmem:[%s104] sm:$0xf]
  %106 = xla_tuple %v105
  %107 = xla_tuple %106
  %v108 = vxor.u32 %v105, 2147483648
  %109 = xla_tuple %v108
  %s110 = scalar_lea.vmem %s1, 52
  %111 = vst [vmem:[%s110] sm:$0xf] %v108
  %s112 = scalar_lea.vmem %s0, 88
  %v113 = vld [vmem:[%s112] sm:$0xf]
  %114 = xla_tuple %v113
  %115 = xla_tuple %114
  %v116 = vxor.u32 %v113, 2147483648
  %117 = xla_tuple %v116
  %s118 = scalar_lea.vmem %s1, 88
  %119 = vst [vmem:[%s118] sm:$0xf] %v116
  %s120 = scalar_lea.vmem %s0, 28
  %v121 = vld [vmem:[%s120] sm:$0xf]
  %122 = xla_tuple %v121
  %123 = xla_tuple %122
  %v124 = vxor.u32 %v121, 2147483648
  %125 = xla_tuple %v124
  %s126 = scalar_lea.vmem %s1, 28
  %127 = vst [vmem:[%s126] sm:$0xf] %v124
  %s128 = scalar_lea.vmem %s0, 64
  %v129 = vld [vmem:[%s128] sm:$0xf]
  %130 = xla_tuple %v129
  %131 = xla_tuple %130
  %v132 = vxor.u32 %v129, 2147483648
  %133 = xla_tuple %v132
  %s134 = scalar_lea.vmem %s1, 64
  %135 = vst [vmem:[%s134] sm:$0xf] %v132
  %s136 = scalar_lea.vmem %s0, 100
  %v137 = vld [vmem:[%s136] sm:$0xf]
  %138 = xla_tuple %v137
  %139 = xla_tuple %138
  %v140 = vxor.u32 %v137, 2147483648
  %141 = xla_tuple %v140
  %s142 = scalar_lea.vmem %s1, 100
  %143 = vst [vmem:[%s142] sm:$0xf] %v140
  %s144 = scalar_lea.vmem %s0, 8
  %v145 = vld [vmem:[%s144] sm:$0xf]
  %146 = xla_tuple %v145
  %147 = xla_tuple %146
  %v148 = vxor.u32 %v145, 2147483648
  %149 = xla_tuple %v148
  %s150 = scalar_lea.vmem %s1, 8
  %151 = vst [vmem:[%s150] sm:$0xf] %v148
  %s152 = scalar_lea.vmem %s0, 44
  %v153 = vld [vmem:[%s152] sm:$0xf]
  %154 = xla_tuple %v153
  %155 = xla_tuple %154
  %v156 = vxor.u32 %v153, 2147483648
  %157 = xla_tuple %v156
  %s158 = scalar_lea.vmem %s1, 44
  %159 = vst [vmem:[%s158] sm:$0xf] %v156
  %s160 = scalar_lea.vmem %s0, 80
  %v161 = vld [vmem:[%s160] sm:$0xf]
  %162 = xla_tuple %v161
  %163 = xla_tuple %162
  %v164 = vxor.u32 %v161, 2147483648
  %165 = xla_tuple %v164
  %s166 = scalar_lea.vmem %s1, 80
  %167 = vst [vmem:[%s166] sm:$0xf] %v164
  %s168 = scalar_lea.vmem %s0, 20
  %v169 = vld [vmem:[%s168] sm:$0xf]
  %170 = xla_tuple %v169
  %171 = xla_tuple %170
  %v172 = vxor.u32 %v169, 2147483648
  %173 = xla_tuple %v172
  %s174 = scalar_lea.vmem %s1, 20
  %175 = vst [vmem:[%s174] sm:$0xf] %v172
  %s176 = scalar_lea.vmem %s0, 56
  %v177 = vld [vmem:[%s176] sm:$0xf]
  %178 = xla_tuple %v177
  %179 = xla_tuple %178
  %v180 = vxor.u32 %v177, 2147483648
  %181 = xla_tuple %v180
  %s182 = scalar_lea.vmem %s1, 56
  %183 = vst [vmem:[%s182] sm:$0xf] %v180
  %s184 = scalar_lea.vmem %s0, 92
  %v185 = vld [vmem:[%s184] sm:$0xf]
  %186 = xla_tuple %v185
  %187 = xla_tuple %186
  %v188 = vxor.u32 %v185, 2147483648
  %189 = xla_tuple %v188
  %s190 = scalar_lea.vmem %s1, 92
  %191 = vst [vmem:[%s190] sm:$0xf] %v188
  %s192 = scalar_lea.vmem %s0, 32
  %v193 = vld [vmem:[%s192] sm:$0xf]
  %194 = xla_tuple %v193
  %195 = xla_tuple %194
  %v196 = vxor.u32 %v193, 2147483648
  %197 = xla_tuple %v196
  %s198 = scalar_lea.vmem %s1, 32
  %199 = vst [vmem:[%s198] sm:$0xf] %v196
  %s200 = scalar_lea.vmem %s0, 68
  %v201 = vld [vmem:[%s200] sm:$0xf]
  %202 = xla_tuple %v201
  %203 = xla_tuple %202
  %v204 = vxor.u32 %v201, 2147483648
  %205 = xla_tuple %v204
  %s206 = scalar_lea.vmem %s1, 68
  %207 = vst [vmem:[%s206] sm:$0xf] %v204
  %s208 = scalar_lea.vmem %s0, 104
  %v209 = vld [vmem:[%s208] sm:$0xf]
  %210 = xla_tuple %v209
  %211 = xla_tuple %210
  %v212 = vxor.u32 %v209, 2147483648
  %213 = xla_tuple %v212
  %s214 = scalar_lea.vmem %s1, 104
  %215 = vst [vmem:[%s214] sm:$0xf] %v212

// kernel: ccnn_forward.1
$region0: #{ccnn_forward.1}
  #allocation0 [shape = 'u32[]', space=smem, size = 0x4, offset = 0x4, fixed_abs, tag = 'smem constant byte address 0x4 - core index']
  #allocation1 [shape = 'u32[144,128]{1,0:T(1,128)}', space=vmem, size = 0x12000, scoped, tag = 'internal scratch']
  %s0 = inlined_call_operand.vmem [shape: bf16[128,2048], index: 0, kind: input, shape index: {}]
  %s1 = inlined_call_operand.vmem [shape: bf16[2048,128], index: 1, kind: input, shape index: {}]
  %s2 = inlined_call_operand.vmem [shape: f32[128,128], index: 2, kind: output, shape index: {}]
  %s3 = sld [smem:[#allocation0]]
  $region41: #{ccnn_forward.1} parent=0
    _
  %s5 = ssub.s32 1, %s3
  %s6 = scalar_select 0, %s5, %s3
  loop: start=0, step=1, limit=10
  $region2: #{ccnn_forward.1} parent=0 // loop_pre_header
    _
  $region3: #{ccnn_forward.1} parent=0 // loop_header
    %s8 = sphi 0, %s12
    %p9 = scmp.ge.s32.totalorder %s8, 10
    %s18 = sphi 0, %s20
    %s21 = sphi 0, %s18
    %s22 = sphi 0, %s21
    %s38 = sphi 0, %s22
    %s42 = sphi 0, %s42
    %s44 = sphi 0, %s42
    %s45 = sphi 0, %s44
    %s59 = sphi 0, %s45
    %s65 = sphi 0, %s67
    %s68 = sphi 0, %s65
    %s69 = sphi 0, %s68
    %s85 = sphi 0, %s69
  $region4: #{ccnn_forward.1} parent=0 // loop_header_branch
    %11 = sbr.rel (%p9) target = $region8
  $region5: #{ccnn_forward.1} parent=0 // loop_body
    %s13 = ssub.s32 %s8, 1
    %s14 = ssub.s32 %s8, 2
    %s15 = sadd.s32 %s8, 1
    %s16 = ssub.s32 %s8, %s15
    %p17 = scmp.eq.s32.totalorder %s16, 0
    %s19 = sadd.s32 %s18, 1
    %s20 = scalar_select %p17, %s18, %s19
    %p23 = pneg %p17
    %p24 = scmp.eq.s32.totalorder %s8, 7
    %p25 = por %p23, %p24
    %p26 = scmp.ne.s32.totalorder %s18, %s21
    %p27 = scmp.eq.s32.totalorder %s8, 0
    %p28 = por %p26, %p27
    %p29 = scmp.ne.s32.totalorder %s18, %s21
    %p30 = scmp.eq.s32.totalorder %s13, 7
    %p31 = por %p29, %p30
    %p32 = scmp.ne.s32.totalorder %s21, %s22
    %p33 = scmp.eq.s32.totalorder %s13, 0
    %p34 = por %p32, %p33
    %p35 = scmp.ne.s32.totalorder %s21, %s22
    %p36 = scmp.eq.s32.totalorder %s14, 7
    %p37 = por %p35, %p36
    %p39 = scmp.ne.s32.totalorder %s22, %s38
    %p40 = scmp.eq.s32.totalorder %s14, 0
    %p41 = por %p39, %p40
    %s43 = sadd.s32 %s42, 1
    %p46 = scmp.eq.s32.totalorder %s8, 7
    %p47 = scmp.ne.s32.totalorder %s42, %s44
    %p48 = scmp.eq.s32.totalorder %s8, 0
    %p49 = por %p47, %p48
    %p50 = scmp.ne.s32.totalorder %s42, %s44
    %p51 = scmp.eq.s32.totalorder %s13, 7
    %p52 = por %p50, %p51
    %p53 = scmp.ne.s32.totalorder %s44, %s45
    %p54 = scmp.eq.s32.totalorder %s13, 0
    %p55 = por %p53, %p54
    %p56 = scmp.ne.s32.totalorder %s44, %s45
    %p57 = scmp.eq.s32.totalorder %s14, 7
    %p58 = por %p56, %p57
    %p60 = scmp.ne.s32.totalorder %s45, %s59
    %p61 = scmp.eq.s32.totalorder %s14, 0
    %p62 = por %p60, %p61
    %s63 = ssub.s32 %s8, %s15
    %p64 = scmp.eq.s32.totalorder %s63, 0
    %s66 = sadd.s32 %s65, 1
    %s67 = scalar_select %p64, %s65, %s66
    %p70 = pneg %p64
    %p71 = scmp.eq.s32.totalorder %s8, 7
    %p72 = por %p70, %p71
    %p73 = scmp.ne.s32.totalorder %s65, %s68
    %p74 = scmp.eq.s32.totalorder %s8, 0
    %p75 = por %p73, %p74
    %p76 = scmp.ne.s32.totalorder %s65, %s68
    %p77 = scmp.eq.s32.totalorder %s13, 7
    %p78 = por %p76, %p77
    %p79 = scmp.ne.s32.totalorder %s68, %s69
    %p80 = scmp.eq.s32.totalorder %s13, 0
    %p81 = por %p79, %p80
    %p82 = scmp.ne.s32.totalorder %s68, %s69
    %p83 = scmp.eq.s32.totalorder %s14, 7
    %p84 = por %p82, %p83
    %p86 = scmp.ne.s32.totalorder %s69, %s85
    %p87 = scmp.eq.s32.totalorder %s14, 0
    %p88 = por %p86, %p87
    %p89 = scmp.le.s32.totalorder 1, %s8
    %p90 = scmp.lt.s32.totalorder %s8, 9
    %p91 = pnand %p89, %p90
    %p92 = pneg %p91
    // Predicated region
    $region9: #{ccnn_forward.1} parent=5 // pred_check
      _
    $region10: #{ccnn_forward.1} parent=5 // pred_check_branch
      %94 = sbr.rel (%p91) target = $region12
    $region11: #{ccnn_forward.1} parent=5 // pred_region
      %s95 = ssub.s32 %s8, 1
      // Predicated region
      $region13: #{ccnn_forward.1} parent=11 // pred_check
        %p96 = pneg %p55
      $region14: #{ccnn_forward.1} parent=11 // pred_check_branch
        %98 = sbr.rel (%p96) target = $region16
      $region15: #{ccnn_forward.1} parent=11 // pred_region
        _
      $region16: #{ccnn_forward.1} parent=11 // pred_fallthru
        _
    $region12: #{ccnn_forward.1} parent=5 // pred_fallthru
      _
    %p99 = scmp.lt.s32.totalorder %s8, 8
    // Predicated region
    $region17: #{ccnn_forward.1} parent=5 // pred_check
      %p100 = pneg %p99
    $region18: #{ccnn_forward.1} parent=5 // pred_check_branch
      %102 = sbr.rel (%p100) target = $region20
    $region19: #{ccnn_forward.1} parent=5 // pred_region
      // Predicated region
      $region21: #{ccnn_forward.1} parent=19 // pred_check
        %p103 = pneg %p28
      $region22: #{ccnn_forward.1} parent=19 // pred_check_branch
        %105 = sbr.rel (%p103) target = $region24
      $region23: #{ccnn_forward.1} parent=19 // pred_region
        %s106 = smul.u32 2, %s8
        %p107 = scmp.lt.s32.totalorder %s106, 15
        %s108 = scalar_select %p107, %s106, 15
        %s109 = smul.addr %s108, 16
        %s110 = smul.addr %s109, 4
        %s111 = scalar_lea.vmem %s0, %s110
        %s112 = smul.u32 2, %s8
      $region24: #{ccnn_forward.1} parent=19 // pred_fallthru
        _
    $region20: #{ccnn_forward.1} parent=5 // pred_fallthru
      _
    %p113 = scmp.le.s32.totalorder 1, %s8
    %p114 = scmp.lt.s32.totalorder %s8, 9
    %p115 = pnand %p113, %p114
    %p116 = pneg %p115
    // Predicated region
    $region25: #{ccnn_forward.1} parent=5 // pred_check
      _
    $region26: #{ccnn_forward.1} parent=5 // pred_check_branch
      %118 = sbr.rel (%p115) target = $region28
    $region27: #{ccnn_forward.1} parent=5 // pred_region
      %s119 = ssub.s32 %s8, 1
      %s120 = smul.u32 2, %s13
      %p121 = scmp.lt.s32.totalorder %s120, 15
      %s122 = scalar_select %p121, %s120, 15
      %s123 = smul.addr %s122, 16
      %s124 = smul.addr %s123, 4
      %s125 = scalar_lea.vmem %s0, %s124
      %p126 = pneg %p34
      %p127 = pneg %p31
      %p128 = pneg %p55
      %p129 = pneg %p52
      %p130 = pneg %p81
      %p131 = pneg %p78
      %s132 = smul.u32 2, %s13
      %p133 = scmp.lt.s32.totalorder %s132, 15
      %s134 = scalar_select %p133, %s132, 15
      %s135 = smul.addr %s134, 8
      %s136 = scalar_lea.vmem %s2, %s135
      %s137 = smul.u32 2, %s13
      %p138 = scmp.lt.s32.totalorder %s137, 15
      %s139 = scalar_select %p138, %s137, 15
      %s140 = smul.addr %s139, 16
      %s141 = smul.addr %s140, 4
      %s142 = scalar_lea.vmem %s0, %s141
      %s143 = smul.u32 2, %s13
      %s144 = smul.u32 2, %s13
      %p145 = scmp.lt.s32.totalorder %s144, 15
      %s146 = scalar_select %p145, %s144, 15
      %s147 = smul.addr %s146, 8
      %s148 = scalar_lea.vmem %s2, %s147
      %s149 = smul.u32 2, %s13
      %v151 = vld [vmem:[%s142] sm:$0xff]
      %v152 = vld [vmem:[%s142 + $0x8] sm:$0xff]
      %v153 = vld [vmem:[%s142 + $0x10] sm:$0xff]
      %v154 = vld [vmem:[%s142 + $0x18] sm:$0xff]
      %v155 = vld [vmem:[%s142 + $0x20] sm:$0xff]
      %v156 = vld [vmem:[%s142 + $0x28] sm:$0xff]
      %v157 = vld [vmem:[%s142 + $0x30] sm:$0xff]
      %v158 = vld [vmem:[%s142 + $0x38] sm:$0xff]
      %v159 = vld [vmem:[%s142 + $0x40] sm:$0xff]
      %v160 = vld [vmem:[%s142 + $0x48] sm:$0xff]
      %v161 = vld [vmem:[%s142 + $0x50] sm:$0xff]
      %v162 = vld [vmem:[%s142 + $0x58] sm:$0xff]
      %v163 = vld [vmem:[%s142 + $0x60] sm:$0xff]
      %v164 = vld [vmem:[%s142 + $0x68] sm:$0xff]
      %v165 = vld [vmem:[%s142 + $0x70] sm:$0xff]
      %v166 = vld [vmem:[%s142 + $0x78] sm:$0xff]
      %v167 = vld [vmem:[%s1] sm:$0xf]
      %v168 = vld [vmem:[%s1 + $0x4] sm:$0xf]
      %v169 = vld [vmem:[%s1 + $0x8] sm:$0xf]
      %v170 = vld [vmem:[%s1 + $0xc] sm:$0xf]
      %v171 = vld [vmem:[%s1 + $0x10] sm:$0xf]
      %v172 = vld [vmem:[%s1 + $0x14] sm:$0xf]
      %v173 = vld [vmem:[%s1 + $0x18] sm:$0xf]
      %v174 = vld [vmem:[%s1 + $0x1c] sm:$0xf]
      %v175 = vld [vmem:[%s1 + $0x20] sm:$0xf]
      %v176 = vld [vmem:[%s1 + $0x24] sm:$0xf]
      %v177 = vld [vmem:[%s1 + $0x28] sm:$0xf]
      %v178 = vld [vmem:[%s1 + $0x2c] sm:$0xf]
      %v179 = vld [vmem:[%s1 + $0x30] sm:$0xf]
      %v180 = vld [vmem:[%s1 + $0x34] sm:$0xf]
      %v181 = vld [vmem:[%s1 + $0x38] sm:$0xf]
      %v182 = vld [vmem:[%s1 + $0x3c] sm:$0xf]
      %v183 = vld [vmem:[%s1 + $0x40] sm:$0xf]
      %v184 = vld [vmem:[%s1 + $0x44] sm:$0xf]
      %v185 = vld [vmem:[%s1 + $0x48] sm:$0xf]
      %v186 = vld [vmem:[%s1 + $0x4c] sm:$0xf]
      %v187 = vld [vmem:[%s1 + $0x50] sm:$0xf]
      %v188 = vld [vmem:[%s1 + $0x54] sm:$0xf]
      %v189 = vld [vmem:[%s1 + $0x58] sm:$0xf]
      %v190 = vld [vmem:[%s1 + $0x5c] sm:$0xf]
      %v191 = vld [vmem:[%s1 + $0x60] sm:$0xf]
      %v192 = vld [vmem:[%s1 + $0x64] sm:$0xf]
      %v193 = vld [vmem:[%s1 + $0x68] sm:$0xf]
      %v194 = vld [vmem:[%s1 + $0x6c] sm:$0xf]
      %v195 = vld [vmem:[%s1 + $0x70] sm:$0xf]
      %v196 = vld [vmem:[%s1 + $0x74] sm:$0xf]
      %v197 = vld [vmem:[%s1 + $0x78] sm:$0xf]
      %v198 = vld [vmem:[%s1 + $0x7c] sm:$0xf]
      %v199 = vld [vmem:[%s1 + $0x80] sm:$0xf]
      %v200 = vld [vmem:[%s1 + $0x84] sm:$0xf]
      %v201 = vld [vmem:[%s1 + $0x88] sm:$0xf]
      %v202 = vld [vmem:[%s1 + $0x8c] sm:$0xf]
      %v203 = vld [vmem:[%s1 + $0x90] sm:$0xf]
      %v204 = vld [vmem:[%s1 + $0x94] sm:$0xf]
      %v205 = vld [vmem:[%s1 + $0x98] sm:$0xf]
      %v206 = vld [vmem:[%s1 + $0x9c] sm:$0xf]
      %v207 = vld [vmem:[%s1 + $0xa0] sm:$0xf]
      %v208 = vld [vmem:[%s1 + $0xa4] sm:$0xf]
      %v209 = vld [vmem:[%s1 + $0xa8] sm:$0xf]
      %v210 = vld [vmem:[%s1 + $0xac] sm:$0xf]
      %v211 = vld [vmem:[%s1 + $0xb0] sm:$0xf]
      %v212 = vld [vmem:[%s1 + $0xb4] sm:$0xf]
      %v213 = vld [vmem:[%s1 + $0xb8] sm:$0xf]
      %v214 = vld [vmem:[%s1 + $0xbc] sm:$0xf]
      %v215 = vld [vmem:[%s1 + $0xc0] sm:$0xf]
      %v216 = vld [vmem:[%s1 + $0xc4] sm:$0xf]
      %v217 = vld [vmem:[%s1 + $0xc8] sm:$0xf]
      %v218 = vld [vmem:[%s1 + $0xcc] sm:$0xf]
      %v219 = vld [vmem:[%s1 + $0xd0] sm:$0xf]
      %v220 = vld [vmem:[%s1 + $0xd4] sm:$0xf]
      %v221 = vld [vmem:[%s1 + $0xd8] sm:$0xf]
      %v222 = vld [vmem:[%s1 + $0xdc] sm:$0xf]
      %v223 = vld [vmem:[%s1 + $0xe0] sm:$0xf]
      %v224 = vld [vmem:[%s1 + $0xe4] sm:$0xf]
      %v225 = vld [vmem:[%s1 + $0xe8] sm:$0xf]
      %v226 = vld [vmem:[%s1 + $0xec] sm:$0xf]
      %v227 = vld [vmem:[%s1 + $0xf0] sm:$0xf]
      %v228 = vld [vmem:[%s1 + $0xf4] sm:$0xf]
      %v229 = vld [vmem:[%s1 + $0xf8] sm:$0xf]
      %v230 = vld [vmem:[%s1 + $0xfc] sm:$0xf]
      %v231 = vld [vmem:[%s1 + $0x100] sm:$0xf]
      %v232 = vld [vmem:[%s1 + $0x104] sm:$0xf]
      %v233 = vld [vmem:[%s1 + $0x108] sm:$0xf]
      %v234 = vld [vmem:[%s1 + $0x10c] sm:$0xf]
      %v235 = vld [vmem:[%s1 + $0x110] sm:$0xf]
      %v236 = vld [vmem:[%s1 + $0x114] sm:$0xf]
      %v237 = vld [vmem:[%s1 + $0x118] sm:$0xf]
      %v238 = vld [vmem:[%s1 + $0x11c] sm:$0xf]
      %v239 = vld [vmem:[%s1 + $0x120] sm:$0xf]
      %v240 = vld [vmem:[%s1 + $0x124] sm:$0xf]
      %v241 = vld [vmem:[%s1 + $0x128] sm:$0xf]
      %v242 = vld [vmem:[%s1 + $0x12c] sm:$0xf]
      %v243 = vld [vmem:[%s1 + $0x130] sm:$0xf]
      %v244 = vld [vmem:[%s1 + $0x134] sm:$0xf]
      %v245 = vld [vmem:[%s1 + $0x138] sm:$0xf]
      %v246 = vld [vmem:[%s1 + $0x13c] sm:$0xf]
      %v247 = vld [vmem:[%s1 + $0x140] sm:$0xf]
      %v248 = vld [vmem:[%s1 + $0x144] sm:$0xf]
      %v249 = vld [vmem:[%s1 + $0x148] sm:$0xf]
      %v250 = vld [vmem:[%s1 + $0x14c] sm:$0xf]
      %v251 = vld [vmem:[%s1 + $0x150] sm:$0xf]
      %v252 = vld [vmem:[%s1 + $0x154] sm:$0xf]
      %v253 = vld [vmem:[%s1 + $0x158] sm:$0xf]
      %v254 = vld [vmem:[%s1 + $0x15c] sm:$0xf]
      %v255 = vld [vmem:[%s1 + $0x160] sm:$0xf]
      %v256 = vld [vmem:[%s1 + $0x164] sm:$0xf]
      %v257 = vld [vmem:[%s1 + $0x168] sm:$0xf]
      %v258 = vld [vmem:[%s1 + $0x16c] sm:$0xf]
      %v259 = vld [vmem:[%s1 + $0x170] sm:$0xf]
      %v260 = vld [vmem:[%s1 + $0x174] sm:$0xf]
      %v261 = vld [vmem:[%s1 + $0x178] sm:$0xf]
      %v262 = vld [vmem:[%s1 + $0x17c] sm:$0xf]
      %v263 = vld [vmem:[%s1 + $0x180] sm:$0xf]
      %v264 = vld [vmem:[%s1 + $0x184] sm:$0xf]
      %v265 = vld [vmem:[%s1 + $0x188] sm:$0xf]
      %v266 = vld [vmem:[%s1 + $0x18c] sm:$0xf]
      %v267 = vld [vmem:[%s1 + $0x190] sm:$0xf]
      %v268 = vld [vmem:[%s1 + $0x194] sm:$0xf]
      %v269 = vld [vmem:[%s1 + $0x198] sm:$0xf]
      %v270 = vld [vmem:[%s1 + $0x19c] sm:$0xf]
      %v271 = vld [vmem:[%s1 + $0x1a0] sm:$0xf]
      %v272 = vld [vmem:[%s1 + $0x1a4] sm:$0xf]
      %v273 = vld [vmem:[%s1 + $0x1a8] sm:$0xf]
      %v274 = vld [vmem:[%s1 + $0x1ac] sm:$0xf]
      %v275 = vld [vmem:[%s1 + $0x1b0] sm:$0xf]
      %v276 = vld [vmem:[%s1 + $0x1b4] sm:$0xf]
      %v277 = vld [vmem:[%s1 + $0x1b8] sm:$0xf]
      %v278 = vld [vmem:[%s1 + $0x1bc] sm:$0xf]
      %v279 = vld [vmem:[%s1 + $0x1c0] sm:$0xf]
      %v280 = vld [vmem:[%s1 + $0x1c4] sm:$0xf]
      %v281 = vld [vmem:[%s1 + $0x1c8] sm:$0xf]
      %v282 = vld [vmem:[%s1 + $0x1cc] sm:$0xf]
      %v283 = vld [vmem:[%s1 + $0x1d0] sm:$0xf]
      %v284 = vld [vmem:[%s1 + $0x1d4] sm:$0xf]
      %v285 = vld [vmem:[%s1 + $0x1d8] sm:$0xf]
      %v286 = vld [vmem:[%s1 + $0x1dc] sm:$0xf]
      %v287 = vld [vmem:[%s1 + $0x1e0] sm:$0xf]
      %v288 = vld [vmem:[%s1 + $0x1e4] sm:$0xf]
      %v289 = vld [vmem:[%s1 + $0x1e8] sm:$0xf]
      %v290 = vld [vmem:[%s1 + $0x1ec] sm:$0xf]
      %v291 = vld [vmem:[%s1 + $0x1f0] sm:$0xf]
      %v292 = vld [vmem:[%s1 + $0x1f4] sm:$0xf]
      %v293 = vld [vmem:[%s1 + $0x1f8] sm:$0xf]
      %v294 = vld [vmem:[%s1 + $0x1fc] sm:$0xf]
      %v295 = vld [vmem:[%s1 + $0x200] sm:$0xf]
      %v296 = vld [vmem:[%s1 + $0x204] sm:$0xf]
      %v297 = vld [vmem:[%s1 + $0x208] sm:$0xf]
      %v298 = vld [vmem:[%s1 + $0x20c] sm:$0xf]
      %v299 = vld [vmem:[%s1 + $0x210] sm:$0xf]
      %v300 = vld [vmem:[%s1 + $0x214] sm:$0xf]
      %v301 = vld [vmem:[%s1 + $0x218] sm:$0xf]
      %v302 = vld [vmem:[%s1 + $0x21c] sm:$0xf]
      %v303 = vld [vmem:[%s1 + $0x220] sm:$0xf]
      %v304 = vld [vmem:[%s1 + $0x224] sm:$0xf]
      %v305 = vld [vmem:[%s1 + $0x228] sm:$0xf]
      %v306 = vld [vmem:[%s1 + $0x22c] sm:$0xf]
      %v307 = vld [vmem:[%s1 + $0x230] sm:$0xf]
      %v308 = vld [vmem:[%s1 + $0x234] sm:$0xf]
      %v309 = vld [vmem:[%s1 + $0x238] sm:$0xf]
      %v310 = vld [vmem:[%s1 + $0x23c] sm:$0xf]
      %v311 = vld [vmem:[%s1 + $0x240] sm:$0xf]
      %v312 = vld [vmem:[%s1 + $0x244] sm:$0xf]
      %v313 = vld [vmem:[%s1 + $0x248] sm:$0xf]
      %v314 = vld [vmem:[%s1 + $0x24c] sm:$0xf]
      %v315 = vld [vmem:[%s1 + $0x250] sm:$0xf]
      %v316 = vld [vmem:[%s1 + $0x254] sm:$0xf]
      %v317 = vld [vmem:[%s1 + $0x258] sm:$0xf]
      %v318 = vld [vmem:[%s1 + $0x25c] sm:$0xf]
      %v319 = vld [vmem:[%s1 + $0x260] sm:$0xf]
      %v320 = vld [vmem:[%s1 + $0x264] sm:$0xf]
      %v321 = vld [vmem:[%s1 + $0x268] sm:$0xf]
      %v322 = vld [vmem:[%s1 + $0x26c] sm:$0xf]
      %v323 = vld [vmem:[%s1 + $0x270] sm:$0xf]
      %v324 = vld [vmem:[%s1 + $0x274] sm:$0xf]
      %v325 = vld [vmem:[%s1 + $0x278] sm:$0xf]
      %v326 = vld [vmem:[%s1 + $0x27c] sm:$0xf]
      %v327 = vld [vmem:[%s1 + $0x280] sm:$0xf]
      %v328 = vld [vmem:[%s1 + $0x284] sm:$0xf]
      %v329 = vld [vmem:[%s1 + $0x288] sm:$0xf]
      %v330 = vld [vmem:[%s1 + $0x28c] sm:$0xf]
      %v331 = vld [vmem:[%s1 + $0x290] sm:$0xf]
      %v332 = vld [vmem:[%s1 + $0x294] sm:$0xf]
      %v333 = vld [vmem:[%s1 + $0x298] sm:$0xf]
      %v334 = vld [vmem:[%s1 + $0x29c] sm:$0xf]
      %v335 = vld [vmem:[%s1 + $0x2a0] sm:$0xf]
      %v336 = vld [vmem:[%s1 + $0x2a4] sm:$0xf]
      %v337 = vld [vmem:[%s1 + $0x2a8] sm:$0xf]
      %v338 = vld [vmem:[%s1 + $0x2ac] sm:$0xf]
      %v339 = vld [vmem:[%s1 + $0x2b0] sm:$0xf]
      %v340 = vld [vmem:[%s1 + $0x2b4] sm:$0xf]
      %v341 = vld [vmem:[%s1 + $0x2b8] sm:$0xf]
      %v342 = vld [vmem:[%s1 + $0x2bc] sm:$0xf]
      %v343 = vld [vmem:[%s1 + $0x2c0] sm:$0xf]
      %v344 = vld [vmem:[%s1 + $0x2c4] sm:$0xf]
      %v345 = vld [vmem:[%s1 + $0x2c8] sm:$0xf]
      %v346 = vld [vmem:[%s1 + $0x2cc] sm:$0xf]
      %v347 = vld [vmem:[%s1 + $0x2d0] sm:$0xf]
      %v348 = vld [vmem:[%s1 + $0x2d4] sm:$0xf]
      %v349 = vld [vmem:[%s1 + $0x2d8] sm:$0xf]
      %v350 = vld [vmem:[%s1 + $0x2dc] sm:$0xf]
      %v351 = vld [vmem:[%s1 + $0x2e0] sm:$0xf]
      %v352 = vld [vmem:[%s1 + $0x2e4] sm:$0xf]
      %v353 = vld [vmem:[%s1 + $0x2e8] sm:$0xf]
      %v354 = vld [vmem:[%s1 + $0x2ec] sm:$0xf]
      %v355 = vld [vmem:[%s1 + $0x2f0] sm:$0xf]
      %v356 = vld [vmem:[%s1 + $0x2f4] sm:$0xf]
      %v357 = vld [vmem:[%s1 + $0x2f8] sm:$0xf]
      %v358 = vld [vmem:[%s1 + $0x2fc] sm:$0xf]
      %v359 = vld [vmem:[%s1 + $0x300] sm:$0xf]
      %v360 = vld [vmem:[%s1 + $0x304] sm:$0xf]
      %v361 = vld [vmem:[%s1 + $0x308] sm:$0xf]
      %v362 = vld [vmem:[%s1 + $0x30c] sm:$0xf]
      %v363 = vld [vmem:[%s1 + $0x310] sm:$0xf]
      %v364 = vld [vmem:[%s1 + $0x314] sm:$0xf]
      %v365 = vld [vmem:[%s1 + $0x318] sm:$0xf]
      %v366 = vld [vmem:[%s1 + $0x31c] sm:$0xf]
      %v367 = vld [vmem:[%s1 + $0x320] sm:$0xf]
      %v368 = vld [vmem:[%s1 + $0x324] sm:$0xf]
      %v369 = vld [vmem:[%s1 + $0x328] sm:$0xf]
      %v370 = vld [vmem:[%s1 + $0x32c] sm:$0xf]
      %v371 = vld [vmem:[%s1 + $0x330] sm:$0xf]
      %v372 = vld [vmem:[%s1 + $0x334] sm:$0xf]
      %v373 = vld [vmem:[%s1 + $0x338] sm:$0xf]
      %v374 = vld [vmem:[%s1 + $0x33c] sm:$0xf]
      %v375 = vld [vmem:[%s1 + $0x340] sm:$0xf]
      %v376 = vld [vmem:[%s1 + $0x344] sm:$0xf]
      %v377 = vld [vmem:[%s1 + $0x348] sm:$0xf]
      %v378 = vld [vmem:[%s1 + $0x34c] sm:$0xf]
      %v379 = vld [vmem:[%s1 + $0x350] sm:$0xf]
      %v380 = vld [vmem:[%s1 + $0x354] sm:$0xf]
      %v381 = vld [vmem:[%s1 + $0x358] sm:$0xf]
      %v382 = vld [vmem:[%s1 + $0x35c] sm:$0xf]
      %v383 = vld [vmem:[%s1 + $0x360] sm:$0xf]
      %v384 = vld [vmem:[%s1 + $0x364] sm:$0xf]
      %v385 = vld [vmem:[%s1 + $0x368] sm:$0xf]
      %v386 = vld [vmem:[%s1 + $0x36c] sm:$0xf]
      %v387 = vld [vmem:[%s1 + $0x370] sm:$0xf]
      %v388 = vld [vmem:[%s1 + $0x374] sm:$0xf]
      %v389 = vld [vmem:[%s1 + $0x378] sm:$0xf]
      %v390 = vld [vmem:[%s1 + $0x37c] sm:$0xf]
      %v391 = vld [vmem:[%s1 + $0x380] sm:$0xf]
      %v392 = vld [vmem:[%s1 + $0x384] sm:$0xf]
      %v393 = vld [vmem:[%s1 + $0x388] sm:$0xf]
      %v394 = vld [vmem:[%s1 + $0x38c] sm:$0xf]
      %v395 = vld [vmem:[%s1 + $0x390] sm:$0xf]
      %v396 = vld [vmem:[%s1 + $0x394] sm:$0xf]
      %v397 = vld [vmem:[%s1 + $0x398] sm:$0xf]
      %v398 = vld [vmem:[%s1 + $0x39c] sm:$0xf]
      %v399 = vld [vmem:[%s1 + $0x3a0] sm:$0xf]
      %v400 = vld [vmem:[%s1 + $0x3a4] sm:$0xf]
      %v401 = vld [vmem:[%s1 + $0x3a8] sm:$0xf]
      %v402 = vld [vmem:[%s1 + $0x3ac] sm:$0xf]
      %v403 = vld [vmem:[%s1 + $0x3b0] sm:$0xf]
      %v404 = vld [vmem:[%s1 + $0x3b4] sm:$0xf]
      %v405 = vld [vmem:[%s1 + $0x3b8] sm:$0xf]
      %v406 = vld [vmem:[%s1 + $0x3bc] sm:$0xf]
      %v407 = vld [vmem:[%s1 + $0x3c0] sm:$0xf]
      %v408 = vld [vmem:[%s1 + $0x3c4] sm:$0xf]
      %v409 = vld [vmem:[%s1 + $0x3c8] sm:$0xf]
      %v410 = vld [vmem:[%s1 + $0x3cc] sm:$0xf]
      %v411 = vld [vmem:[%s1 + $0x3d0] sm:$0xf]
      %v412 = vld [vmem:[%s1 + $0x3d4] sm:$0xf]
      %v413 = vld [vmem:[%s1 + $0x3d8] sm:$0xf]
      %v414 = vld [vmem:[%s1 + $0x3dc] sm:$0xf]
      %v415 = vld [vmem:[%s1 + $0x3e0] sm:$0xf]
      %v416 = vld [vmem:[%s1 + $0x3e4] sm:$0xf]
      %v417 = vld [vmem:[%s1 + $0x3e8] sm:$0xf]
      %v418 = vld [vmem:[%s1 + $0x3ec] sm:$0xf]
      %v419 = vld [vmem:[%s1 + $0x3f0] sm:$0xf]
      %v420 = vld [vmem:[%s1 + $0x3f4] sm:$0xf]
      %v421 = vld [vmem:[%s1 + $0x3f8] sm:$0xf]
      %v422 = vld [vmem:[%s1 + $0x3fc] sm:$0xf]
      %v439 = vunpack.c.l.b16 %v151
      %v440 = vunpack.c.h.b16 %v151
      %v441 = vunpack.c.l.b16 %v152
      %v442 = vunpack.c.h.b16 %v152
      %v443 = vunpack.c.l.b16 %v153
      %v444 = vunpack.c.h.b16 %v153
      %v445 = vunpack.c.l.b16 %v154
      %v446 = vunpack.c.h.b16 %v154
      %v447 = vunpack.c.l.b16 %v155
      %v448 = vunpack.c.h.b16 %v155
      %v449 = vunpack.c.l.b16 %v156
      %v450 = vunpack.c.h.b16 %v156
      %v451 = vunpack.c.l.b16 %v157
      %v452 = vunpack.c.h.b16 %v157
      %v453 = vunpack.c.l.b16 %v158
      %v454 = vunpack.c.h.b16 %v158
      %v455 = vunpack.c.l.b16 %v159
      %v456 = vunpack.c.h.b16 %v159
      %v457 = vunpack.c.l.b16 %v160
      %v458 = vunpack.c.h.b16 %v160
      %v459 = vunpack.c.l.b16 %v161
      %v460 = vunpack.c.h.b16 %v161
      %v461 = vunpack.c.l.b16 %v162
      %v462 = vunpack.c.h.b16 %v162
      %v463 = vunpack.c.l.b16 %v163
      %v464 = vunpack.c.h.b16 %v163
      %v465 = vunpack.c.l.b16 %v164
      %v466 = vunpack.c.h.b16 %v164
      %v467 = vunpack.c.l.b16 %v165
      %v468 = vunpack.c.h.b16 %v165
      %v469 = vunpack.c.l.b16 %v166
      %v470 = vunpack.c.h.b16 %v166
      %v471 = vpack.c.b16 %v455, %v439
      %v472 = vpack.c.b16 %v456, %v440
      %v473 = vpack.c.b16 %v457, %v441
      %v474 = vpack.c.b16 %v458, %v442
      %v475 = vpack.c.b16 %v459, %v443
      %v476 = vpack.c.b16 %v460, %v444
      %v477 = vpack.c.b16 %v461, %v445
      %v478 = vpack.c.b16 %v462, %v446
      %v479 = vpack.c.b16 %v463, %v447
      %v480 = vpack.c.b16 %v464, %v448
      %v481 = vpack.c.b16 %v465, %v449
      %v482 = vpack.c.b16 %v466, %v450
      %v483 = vpack.c.b16 %v467, %v451
      %v484 = vpack.c.b16 %v468, %v452
      %v485 = vpack.c.b16 %v469, %v453
      %v486 = vpack.c.b16 %v470, %v454
      %v759 = vunpack.c.l.b16 %v167
      %v760 = vunpack.c.l.b16 %v168
      %v761 = vunpack.c.l.b16 %v169
      %v762 = vunpack.c.l.b16 %v170
      %v763 = vunpack.c.l.b16 %v171
      %v764 = vunpack.c.l.b16 %v172
      %v765 = vunpack.c.l.b16 %v173
      %v766 = vunpack.c.l.b16 %v174
      %v767 = vunpack.c.l.b16 %v175
      %v768 = vunpack.c.l.b16 %v176
      %v769 = vunpack.c.l.b16 %v177
      %v770 = vunpack.c.l.b16 %v178
      %v771 = vunpack.c.l.b16 %v179
      %v772 = vunpack.c.l.b16 %v180
      %v773 = vunpack.c.l.b16 %v181
      %v774 = vunpack.c.l.b16 %v182
      %v775 = vunpack.c.l.b16 %v183
      %v776 = vunpack.c.l.b16 %v184
      %v777 = vunpack.c.l.b16 %v185
      %v778 = vunpack.c.l.b16 %v186
      %v779 = vunpack.c.l.b16 %v187
      %v780 = vunpack.c.l.b16 %v188
      %v781 = vunpack.c.l.b16 %v189
      %v782 = vunpack.c.l.b16 %v190
      %v783 = vunpack.c.l.b16 %v191
      %v784 = vunpack.c.l.b16 %v192
      %v785 = vunpack.c.l.b16 %v193
      %v786 = vunpack.c.l.b16 %v194
      %v787 = vunpack.c.l.b16 %v195
      %v788 = vunpack.c.l.b16 %v196
      %v789 = vunpack.c.l.b16 %v197
      %v790 = vunpack.c.l.b16 %v198
      %v791 = vunpack.c.l.b16 %v199
      %v792 = vunpack.c.l.b16 %v200
      %v793 = vunpack.c.l.b16 %v201
      %v794 = vunpack.c.l.b16 %v202
      %v795 = vunpack.c.l.b16 %v203
      %v796 = vunpack.c.l.b16 %v204
      %v797 = vunpack.c.l.b16 %v205
      %v798 = vunpack.c.l.b16 %v206
      %v799 = vunpack.c.l.b16 %v207
      %v800 = vunpack.c.l.b16 %v208
      %v801 = vunpack.c.l.b16 %v209
      %v802 = vunpack.c.l.b16 %v210
      %v803 = vunpack.c.l.b16 %v211
      %v804 = vunpack.c.l.b16 %v212
      %v805 = vunpack.c.l.b16 %v213
      %v806 = vunpack.c.l.b16 %v214
      %v807 = vunpack.c.l.b16 %v215
      %v808 = vunpack.c.l.b16 %v216
      %v809 = vunpack.c.l.b16 %v217
      %v810 = vunpack.c.l.b16 %v218
      %v811 = vunpack.c.l.b16 %v219
      %v812 = vunpack.c.l.b16 %v220
      %v813 = vunpack.c.l.b16 %v221
      %v814 = vunpack.c.l.b16 %v222
      %v815 = vunpack.c.l.b16 %v223
      %v816 = vunpack.c.l.b16 %v224
      %v817 = vunpack.c.l.b16 %v225
      %v818 = vunpack.c.l.b16 %v226
      %v819 = vunpack.c.l.b16 %v227
      %v820 = vunpack.c.l.b16 %v228
      %v821 = vunpack.c.l.b16 %v229
      %v822 = vunpack.c.l.b16 %v230
      %v823 = vunpack.c.l.b16 %v231
      %v824 = vunpack.c.l.b16 %v232
      %v825 = vunpack.c.l.b16 %v233
      %v826 = vunpack.c.l.b16 %v234
      %v827 = vunpack.c.l.b16 %v235
      %v828 = vunpack.c.l.b16 %v236
      %v829 = vunpack.c.l.b16 %v237
      %v830 = vunpack.c.l.b16 %v238
      %v831 = vunpack.c.l.b16 %v239
      %v832 = vunpack.c.l.b16 %v240
      %v833 = vunpack.c.l.b16 %v241
      %v834 = vunpack.c.l.b16 %v242
      %v835 = vunpack.c.l.b16 %v243
      %v836 = vunpack.c.l.b16 %v244
      %v837 = vunpack.c.l.b16 %v245
      %v838 = vunpack.c.l.b16 %v246
      %v839 = vunpack.c.l.b16 %v247
      %v840 = vunpack.c.l.b16 %v248
      %v841 = vunpack.c.l.b16 %v249
      %v842 = vunpack.c.l.b16 %v250
      %v843 = vunpack.c.l.b16 %v251
      %v844 = vunpack.c.l.b16 %v252
      %v845 = vunpack.c.l.b16 %v253
      %v846 = vunpack.c.l.b16 %v254
      %v847 = vunpack.c.l.b16 %v255
      %v848 = vunpack.c.l.b16 %v256
      %v849 = vunpack.c.l.b16 %v257
      %v850 = vunpack.c.l.b16 %v258
      %v851 = vunpack.c.l.b16 %v259
      %v852 = vunpack.c.l.b16 %v260
      %v853 = vunpack.c.l.b16 %v261
      %v854 = vunpack.c.l.b16 %v262
      %v855 = vunpack.c.l.b16 %v263
      %v856 = vunpack.c.l.b16 %v264
      %v857 = vunpack.c.l.b16 %v265
      %v858 = vunpack.c.l.b16 %v266
      %v859 = vunpack.c.l.b16 %v267
      %v860 = vunpack.c.l.b16 %v268
      %v861 = vunpack.c.l.b16 %v269
      %v862 = vunpack.c.l.b16 %v270
      %v863 = vunpack.c.l.b16 %v271
      %v864 = vunpack.c.l.b16 %v272
      %v865 = vunpack.c.l.b16 %v273
      %v866 = vunpack.c.l.b16 %v274
      %v867 = vunpack.c.l.b16 %v275
      %v868 = vunpack.c.l.b16 %v276
      %v869 = vunpack.c.l.b16 %v277
      %v870 = vunpack.c.l.b16 %v278
      %v871 = vunpack.c.l.b16 %v279
      %v872 = vunpack.c.l.b16 %v280
      %v873 = vunpack.c.l.b16 %v281
      %v874 = vunpack.c.l.b16 %v282
      %v875 = vunpack.c.l.b16 %v283
      %v876 = vunpack.c.l.b16 %v284
      %v877 = vunpack.c.l.b16 %v285
      %v878 = vunpack.c.l.b16 %v286
      %v879 = vunpack.c.l.b16 %v287
      %v880 = vunpack.c.l.b16 %v288
      %v881 = vunpack.c.l.b16 %v289
      %v882 = vunpack.c.l.b16 %v290
      %v883 = vunpack.c.l.b16 %v291
      %v884 = vunpack.c.l.b16 %v292
      %v885 = vunpack.c.l.b16 %v293
      %v886 = vunpack.c.l.b16 %v294
      %v887 = vunpack.c.l.b16 %v295
      %v888 = vunpack.c.l.b16 %v296
      %v889 = vunpack.c.l.b16 %v297
      %v890 = vunpack.c.l.b16 %v298
      %v891 = vunpack.c.l.b16 %v299
      %v892 = vunpack.c.l.b16 %v300
      %v893 = vunpack.c.l.b16 %v301
      %v894 = vunpack.c.l.b16 %v302
      %v895 = vunpack.c.l.b16 %v303
      %v896 = vunpack.c.l.b16 %v304
      %v897 = vunpack.c.l.b16 %v305
      %v898 = vunpack.c.l.b16 %v306
      %v899 = vunpack.c.l.b16 %v307
      %v900 = vunpack.c.l.b16 %v308
      %v901 = vunpack.c.l.b16 %v309
      %v902 = vunpack.c.l.b16 %v310
      %v903 = vunpack.c.l.b16 %v311
      %v904 = vunpack.c.l.b16 %v312
      %v905 = vunpack.c.l.b16 %v313
      %v906 = vunpack.c.l.b16 %v314
      %v907 = vunpack.c.l.b16 %v315
      %v908 = vunpack.c.l.b16 %v316
      %v909 = vunpack.c.l.b16 %v317
      %v910 = vunpack.c.l.b16 %v318
      %v911 = vunpack.c.l.b16 %v319
      %v912 = vunpack.c.l.b16 %v320
      %v913 = vunpack.c.l.b16 %v321
      %v914 = vunpack.c.l.b16 %v322
      %v915 = vunpack.c.l.b16 %v323
      %v916 = vunpack.c.l.b16 %v324
      %v917 = vunpack.c.l.b16 %v325
      %v918 = vunpack.c.l.b16 %v326
      %v919 = vunpack.c.l.b16 %v327
      %v920 = vunpack.c.l.b16 %v328
      %v921 = vunpack.c.l.b16 %v329
      %v922 = vunpack.c.l.b16 %v330
      %v923 = vunpack.c.l.b16 %v331
      %v924 = vunpack.c.l.b16 %v332
      %v925 = vunpack.c.l.b16 %v333
      %v926 = vunpack.c.l.b16 %v334
      %v927 = vunpack.c.l.b16 %v335
      %v928 = vunpack.c.l.b16 %v336
      %v929 = vunpack.c.l.b16 %v337
      %v930 = vunpack.c.l.b16 %v338
      %v931 = vunpack.c.l.b16 %v339
      %v932 = vunpack.c.l.b16 %v340
      %v933 = vunpack.c.l.b16 %v341
      %v934 = vunpack.c.l.b16 %v342
      %v935 = vunpack.c.l.b16 %v343
      %v936 = vunpack.c.l.b16 %v344
      %v937 = vunpack.c.l.b16 %v345
      %v938 = vunpack.c.l.b16 %v346
      %v939 = vunpack.c.l.b16 %v347
      %v940 = vunpack.c.l.b16 %v348
      %v941 = vunpack.c.l.b16 %v349
      %v942 = vunpack.c.l.b16 %v350
      %v943 = vunpack.c.l.b16 %v351
      %v944 = vunpack.c.l.b16 %v352
      %v945 = vunpack.c.l.b16 %v353
      %v946 = vunpack.c.l.b16 %v354
      %v947 = vunpack.c.l.b16 %v355
      %v948 = vunpack.c.l.b16 %v356
      %v949 = vunpack.c.l.b16 %v357
      %v950 = vunpack.c.l.b16 %v358
      %v951 = vunpack.c.l.b16 %v359
      %v952 = vunpack.c.l.b16 %v360
      %v953 = vunpack.c.l.b16 %v361
      %v954 = vunpack.c.l.b16 %v362
      %v955 = vunpack.c.l.b16 %v363
      %v956 = vunpack.c.l.b16 %v364
      %v957 = vunpack.c.l.b16 %v365
      %v958 = vunpack.c.l.b16 %v366
      %v959 = vunpack.c.l.b16 %v367
      %v960 = vunpack.c.l.b16 %v368
      %v961 = vunpack.c.l.b16 %v369
      %v962 = vunpack.c.l.b16 %v370
      %v963 = vunpack.c.l.b16 %v371
      %v964 = vunpack.c.l.b16 %v372
      %v965 = vunpack.c.l.b16 %v373
      %v966 = vunpack.c.l.b16 %v374
      %v967 = vunpack.c.l.b16 %v375
      %v968 = vunpack.c.l.b16 %v376
      %v969 = vunpack.c.l.b16 %v377
      %v970 = vunpack.c.l.b16 %v378
      %v971 = vunpack.c.l.b16 %v379
      %v972 = vunpack.c.l.b16 %v380
      %v973 = vunpack.c.l.b16 %v381
      %v974 = vunpack.c.l.b16 %v382
      %v975 = vunpack.c.l.b16 %v383
      %v976 = vunpack.c.l.b16 %v384
      %v977 = vunpack.c.l.b16 %v385
      %v978 = vunpack.c.l.b16 %v386
      %v979 = vunpack.c.l.b16 %v387
      %v980 = vunpack.c.l.b16 %v388
      %v981 = vunpack.c.l.b16 %v389
      %v982 = vunpack.c.l.b16 %v390
      %v983 = vunpack.c.l.b16 %v391
      %v984 = vunpack.c.l.b16 %v392
      %v985 = vunpack.c.l.b16 %v393
      %v986 = vunpack.c.l.b16 %v394
      %v987 = vunpack.c.l.b16 %v395
      %v988 = vunpack.c.l.b16 %v396
      %v989 = vunpack.c.l.b16 %v397
      %v990 = vunpack.c.l.b16 %v398
      %v991 = vunpack.c.l.b16 %v399
      %v992 = vunpack.c.l.b16 %v400
      %v993 = vunpack.c.l.b16 %v401
      %v994 = vunpack.c.l.b16 %v402
      %v995 = vunpack.c.l.b16 %v403
      %v996 = vunpack.c.l.b16 %v404
      %v997 = vunpack.c.l.b16 %v405
      %v998 = vunpack.c.l.b16 %v406
      %v999 = vunpack.c.l.b16 %v407
      %v1000 = vunpack.c.l.b16 %v408
      %v1001 = vunpack.c.l.b16 %v409
      %v1002 = vunpack.c.l.b16 %v410
      %v1003 = vunpack.c.l.b16 %v411
      %v1004 = vunpack.c.l.b16 %v412
      %v1005 = vunpack.c.l.b16 %v413
      %v1006 = vunpack.c.l.b16 %v414
      %v1007 = vunpack.c.l.b16 %v415
      %v1008 = vunpack.c.l.b16 %v416
      %v1009 = vunpack.c.l.b16 %v417
      %v1010 = vunpack.c.l.b16 %v418
      %v1011 = vunpack.c.l.b16 %v419
      %v1012 = vunpack.c.l.b16 %v420
      %v1013 = vunpack.c.l.b16 %v421
      %v1014 = vunpack.c.l.b16 %v422
      %v1015 = vpack.c.b16 %v760, %v759
      %v1016 = vpack.c.b16 %v762, %v761
      %v1017 = vpack.c.b16 %v764, %v763
      %v1018 = vpack.c.b16 %v766, %v765
      %v1019 = vpack.c.b16 %v768, %v767
      %v1020 = vpack.c.b16 %v770, %v769
      %v1021 = vpack.c.b16 %v772, %v771
      %v1022 = vpack.c.b16 %v774, %v773
      %v1023 = vpack.c.b16 %v776, %v775
      %v1024 = vpack.c.b16 %v778, %v777
      %v1025 = vpack.c.b16 %v780, %v779
      %v1026 = vpack.c.b16 %v782, %v781
      %v1027 = vpack.c.b16 %v784, %v783
      %v1028 = vpack.c.b16 %v786, %v785
      %v1029 = vpack.c.b16 %v788, %v787
      %v1030 = vpack.c.b16 %v790, %v789
      %v1031 = vpack.c.b16 %v792, %v791
      %v1032 = vpack.c.b16 %v794, %v793
      %v1033 = vpack.c.b16 %v796, %v795
      %v1034 = vpack.c.b16 %v798, %v797
      %v1035 = vpack.c.b16 %v800, %v799
      %v1036 = vpack.c.b16 %v802, %v801
      %v1037 = vpack.c.b16 %v804, %v803
      %v1038 = vpack.c.b16 %v806, %v805
      %v1039 = vpack.c.b16 %v808, %v807
      %v1040 = vpack.c.b16 %v810, %v809
      %v1041 = vpack.c.b16 %v812, %v811
      %v1042 = vpack.c.b16 %v814, %v813
      %v1043 = vpack.c.b16 %v816, %v815
      %v1044 = vpack.c.b16 %v818, %v817
      %v1045 = vpack.c.b16 %v820, %v819
      %v1046 = vpack.c.b16 %v822, %v821
      %v1047 = vpack.c.b16 %v824, %v823
      %v1048 = vpack.c.b16 %v826, %v825
      %v1049 = vpack.c.b16 %v828, %v827
      %v1050 = vpack.c.b16 %v830, %v829
      %v1051 = vpack.c.b16 %v832, %v831
      %v1052 = vpack.c.b16 %v834, %v833
      %v1053 = vpack.c.b16 %v836, %v835
      %v1054 = vpack.c.b16 %v838, %v837
      %v1055 = vpack.c.b16 %v840, %v839
      %v1056 = vpack.c.b16 %v842, %v841
      %v1057 = vpack.c.b16 %v844, %v843
      %v1058 = vpack.c.b16 %v846, %v845
      %v1059 = vpack.c.b16 %v848, %v847
      %v1060 = vpack.c.b16 %v850, %v849
      %v1061 = vpack.c.b16 %v852, %v851
      %v1062 = vpack.c.b16 %v854, %v853
      %v1063 = vpack.c.b16 %v856, %v855
      %v1064 = vpack.c.b16 %v858, %v857
      %v1065 = vpack.c.b16 %v860, %v859
      %v1066 = vpack.c.b16 %v862, %v861
      %v1067 = vpack.c.b16 %v864, %v863
      %v1068 = vpack.c.b16 %v866, %v865
      %v1069 = vpack.c.b16 %v868, %v867
      %v1070 = vpack.c.b16 %v870, %v869
      %v1071 = vpack.c.b16 %v872, %v871
      %v1072 = vpack.c.b16 %v874, %v873
      %v1073 = vpack.c.b16 %v876, %v875
      %v1074 = vpack.c.b16 %v878, %v877
      %v1075 = vpack.c.b16 %v880, %v879
      %v1076 = vpack.c.b16 %v882, %v881
      %v1077 = vpack.c.b16 %v884, %v883
      %v1078 = vpack.c.b16 %v886, %v885
      %v1079 = vpack.c.b16 %v888, %v887
      %v1080 = vpack.c.b16 %v890, %v889
      %v1081 = vpack.c.b16 %v892, %v891
      %v1082 = vpack.c.b16 %v894, %v893
      %v1083 = vpack.c.b16 %v896, %v895
      %v1084 = vpack.c.b16 %v898, %v897
      %v1085 = vpack.c.b16 %v900, %v899
      %v1086 = vpack.c.b16 %v902, %v901
      %v1087 = vpack.c.b16 %v904, %v903
      %v1088 = vpack.c.b16 %v906, %v905
      %v1089 = vpack.c.b16 %v908, %v907
      %v1090 = vpack.c.b16 %v910, %v909
      %v1091 = vpack.c.b16 %v912, %v911
      %v1092 = vpack.c.b16 %v914, %v913
      %v1093 = vpack.c.b16 %v916, %v915
      %v1094 = vpack.c.b16 %v918, %v917
      %v1095 = vpack.c.b16 %v920, %v919
      %v1096 = vpack.c.b16 %v922, %v921
      %v1097 = vpack.c.b16 %v924, %v923
      %v1098 = vpack.c.b16 %v926, %v925
      %v1099 = vpack.c.b16 %v928, %v927
      %v1100 = vpack.c.b16 %v930, %v929
      %v1101 = vpack.c.b16 %v932, %v931
      %v1102 = vpack.c.b16 %v934, %v933
      %v1103 = vpack.c.b16 %v936, %v935
      %v1104 = vpack.c.b16 %v938, %v937
      %v1105 = vpack.c.b16 %v940, %v939
      %v1106 = vpack.c.b16 %v942, %v941
      %v1107 = vpack.c.b16 %v944, %v943
      %v1108 = vpack.c.b16 %v946, %v945
      %v1109 = vpack.c.b16 %v948, %v947
      %v1110 = vpack.c.b16 %v950, %v949
      %v1111 = vpack.c.b16 %v952, %v951
      %v1112 = vpack.c.b16 %v954, %v953
      %v1113 = vpack.c.b16 %v956, %v955
      %v1114 = vpack.c.b16 %v958, %v957
      %v1115 = vpack.c.b16 %v960, %v959
      %v1116 = vpack.c.b16 %v962, %v961
      %v1117 = vpack.c.b16 %v964, %v963
      %v1118 = vpack.c.b16 %v966, %v965
      %v1119 = vpack.c.b16 %v968, %v967
      %v1120 = vpack.c.b16 %v970, %v969
      %v1121 = vpack.c.b16 %v972, %v971
      %v1122 = vpack.c.b16 %v974, %v973
      %v1123 = vpack.c.b16 %v976, %v975
      %v1124 = vpack.c.b16 %v978, %v977
      %v1125 = vpack.c.b16 %v980, %v979
      %v1126 = vpack.c.b16 %v982, %v981
      %v1127 = vpack.c.b16 %v984, %v983
      %v1128 = vpack.c.b16 %v986, %v985
      %v1129 = vpack.c.b16 %v988, %v987
      %v1130 = vpack.c.b16 %v990, %v989
      %v1131 = vpack.c.b16 %v992, %v991
      %v1132 = vpack.c.b16 %v994, %v993
      %v1133 = vpack.c.b16 %v996, %v995
      %v1134 = vpack.c.b16 %v998, %v997
      %v1135 = vpack.c.b16 %v1000, %v999
      %v1136 = vpack.c.b16 %v1002, %v1001
      %v1137 = vpack.c.b16 %v1004, %v1003
      %v1138 = vpack.c.b16 %v1006, %v1005
      %v1139 = vpack.c.b16 %v1008, %v1007
      %v1140 = vpack.c.b16 %v1010, %v1009
      %v1141 = vpack.c.b16 %v1012, %v1011
      %v1142 = vpack.c.b16 %v1014, %v1013
      %1271 = vmatprep.subr.bf16.mxu0 0
      %1272 = vmatpush1.bf16.msra.mxu0 %v1015
      %1273 = vmatprep.subr.bf16.mxu0 0
      %1274 = vmatpush1.bf16.msra.mxu0 %v1016
      %1275 = vmatprep.subr.bf16.mxu0 0
      %1276 = vmatpush1.bf16.msra.mxu0 %v1017
      %1277 = vmatprep.subr.bf16.mxu0 0
      %1278 = vmatpush1.bf16.msra.mxu0 %v1018
      %1279 = vmatprep.subr.bf16.mxu0 0
      %1280 = vmatpush1.bf16.msra.mxu0 %v1019
      %1281 = vmatprep.subr.bf16.mxu0 0
      %1282 = vmatpush1.bf16.msra.mxu0 %v1020
      %1283 = vmatprep.subr.bf16.mxu0 0
      %1284 = vmatpush1.bf16.msra.mxu0 %v1021
      %1285 = vmatprep.subr.bf16.mxu0 0
      %1286 = vmatpush1.bf16.msra.mxu0 %v1022
      %1287 = vmatprep.subr.bf16.mxu0 0
      %1288 = vmatpush1.bf16.msra.mxu0 %v1023
      %1289 = vmatprep.subr.bf16.mxu0 0
      %1290 = vmatpush1.bf16.msra.mxu0 %v1024
      %1291 = vmatprep.subr.bf16.mxu0 0
      %1292 = vmatpush1.bf16.msra.mxu0 %v1025
      %1293 = vmatprep.subr.bf16.mxu0 0
      %1294 = vmatpush1.bf16.msra.mxu0 %v1026
      %1295 = vmatprep.subr.bf16.mxu0 0
      %1296 = vmatpush1.bf16.msra.mxu0 %v1027
      %1297 = vmatprep.subr.bf16.mxu0 0
      %1298 = vmatpush1.bf16.msra.mxu0 %v1028
      %1299 = vmatprep.subr.bf16.mxu0 0
      %1300 = vmatpush1.bf16.msra.mxu0 %v1029
      %1301 = vmatprep.subr.bf16.mxu0 0
      %1302 = vmatpush1.bf16.msra.mxu0 %v1030
      %1303 = vmatprep.mubr.bf16.mxu0 %v472
      %1304 = vmatmul.mubr.bf16.gmra.mrb[0].mxu0 %v471
      %v1305 = vpop.f32.mrb[0].mxu0
      %v1306 = vadd.f32 0.0, %v1305
      %v1307 = vpop.f32.mrb[0].mxu0
      %v1308 = vpop.f32.mrb[0].mxu0
      %v1309 = vadd.f32 0.0, %v1308
      %v1310 = vpop.f32.mrb[0].mxu0
      %1311 = vdwg.mxu0
      %1312 = vmatprep.subr.bf16.mxu0 0
      %1313 = vmatpush1.bf16.msra.mxu0 %v1031
      %1314 = vmatprep.subr.bf16.mxu0 0
      %1315 = vmatpush1.bf16.msra.mxu0 %v1032
      %1316 = vmatprep.subr.bf16.mxu0 0
      %1317 = vmatpush1.bf16.msra.mxu0 %v1033
      %1318 = vmatprep.subr.bf16.mxu0 0
      %1319 = vmatpush1.bf16.msra.mxu0 %v1034
      %1320 = vmatprep.subr.bf16.mxu0 0
      %1321 = vmatpush1.bf16.msra.mxu0 %v1035
      %1322 = vmatprep.subr.bf16.mxu0 0
      %1323 = vmatpush1.bf16.msra.mxu0 %v1036
      %1324 = vmatprep.subr.bf16.mxu0 0
      %1325 = vmatpush1.bf16.msra.mxu0 %v1037
      %1326 = vmatprep.subr.bf16.mxu0 0
      %1327 = vmatpush1.bf16.msra.mxu0 %v1038
      %1328 = vmatprep.subr.bf16.mxu0 0
      %1329 = vmatpush1.bf16.msra.mxu0 %v1039
      %1330 = vmatprep.subr.bf16.mxu0 0
      %1331 = vmatpush1.bf16.msra.mxu0 %v1040
      %1332 = vmatprep.subr.bf16.mxu0 0
      %1333 = vmatpush1.bf16.msra.mxu0 %v1041
      %1334 = vmatprep.subr.bf16.mxu0 0
      %1335 = vmatpush1.bf16.msra.mxu0 %v1042
      %1336 = vmatprep.subr.bf16.mxu0 0
      %1337 = vmatpush1.bf16.msra.mxu0 %v1043
      %1338 = vmatprep.subr.bf16.mxu0 0
      %1339 = vmatpush1.bf16.msra.mxu0 %v1044
      %1340 = vmatprep.subr.bf16.mxu0 0
      %1341 = vmatpush1.bf16.msra.mxu0 %v1045
      %1342 = vmatprep.subr.bf16.mxu0 0
      %1343 = vmatpush1.bf16.msra.mxu0 %v1046
      %1344 = vmatprep.mubr.bf16.mxu0 %v474
      %1345 = vmatmul.mubr.bf16.gmra.mrb[0].mxu0 %v473
      %v1346 = vpop.f32.mrb[0].mxu0
      %v1347 = vadd.f32 %v1306, %v1346
      %v1348 = vpop.f32.mrb[0].mxu0
      %v1349 = vpop.f32.mrb[0].mxu0
      %v1350 = vadd.f32 %v1309, %v1349
      %v1351 = vpop.f32.mrb[0].mxu0
      %1352 = vdwg.mxu0
      %1353 = vmatprep.subr.bf16.mxu0 0
      %1354 = vmatpush1.bf16.msra.mxu0 %v1047
      %1355 = vmatprep.subr.bf16.mxu0 0
      %1356 = vmatpush1.bf16.msra.mxu0 %v1048
      %1357 = vmatprep.subr.bf16.mxu0 0
      %1358 = vmatpush1.bf16.msra.mxu0 %v1049
      %1359 = vmatprep.subr.bf16.mxu0 0
      %1360 = vmatpush1.bf16.msra.mxu0 %v1050
      %1361 = vmatprep.subr.bf16.mxu0 0
      %1362 = vmatpush1.bf16.msra.mxu0 %v1051
      %1363 = vmatprep.subr.bf16.mxu0 0
      %1364 = vmatpush1.bf16.msra.mxu0 %v1052
      %1365 = vmatprep.subr.bf16.mxu0 0
      %1366 = vmatpush1.bf16.msra.mxu0 %v1053
      %1367 = vmatprep.subr.bf16.mxu0 0
      %1368 = vmatpush1.bf16.msra.mxu0 %v1054
      %1369 = vmatprep.subr.bf16.mxu0 0
      %1370 = vmatpush1.bf16.msra.mxu0 %v1055
      %1371 = vmatprep.subr.bf16.mxu0 0
      %1372 = vmatpush1.bf16.msra.mxu0 %v1056
      %1373 = vmatprep.subr.bf16.mxu0 0
      %1374 = vmatpush1.bf16.msra.mxu0 %v1057
      %1375 = vmatprep.subr.bf16.mxu0 0
      %1376 = vmatpush1.bf16.msra.mxu0 %v1058
      %1377 = vmatprep.subr.bf16.mxu0 0
      %1378 = vmatpush1.bf16.msra.mxu0 %v1059
      %1379 = vmatprep.subr.bf16.mxu0 0
      %1380 = vmatpush1.bf16.msra.mxu0 %v1060
      %1381 = vmatprep.subr.bf16.mxu0 0
      %1382 = vmatpush1.bf16.msra.mxu0 %v1061
      %1383 = vmatprep.subr.bf16.mxu0 0
      %1384 = vmatpush1.bf16.msra.mxu0 %v1062
      %1385 = vmatprep.mubr.bf16.mxu0 %v476
      %1386 = vmatmul.mubr.bf16.gmra.mrb[0].mxu0 %v475
      %v1387 = vpop.f32.mrb[0].mxu0
      %v1388 = vadd.f32 %v1347, %v1387
      %v1389 = vpop.f32.mrb[0].mxu0
      %v1390 = vpop.f32.mrb[0].mxu0
      %v1391 = vadd.f32 %v1350, %v1390
      %v1392 = vpop.f32.mrb[0].mxu0
      %1393 = vdwg.mxu0
      %1394 = vmatprep.subr.bf16.mxu0 0
      %1395 = vmatpush1.bf16.msra.mxu0 %v1063
      %1396 = vmatprep.subr.bf16.mxu0 0
      %1397 = vmatpush1.bf16.msra.mxu0 %v1064
      %1398 = vmatprep.subr.bf16.mxu0 0
      %1399 = vmatpush1.bf16.msra.mxu0 %v1065
      %1400 = vmatprep.subr.bf16.mxu0 0
      %1401 = vmatpush1.bf16.msra.mxu0 %v1066
      %1402 = vmatprep.subr.bf16.mxu0 0
      %1403 = vmatpush1.bf16.msra.mxu0 %v1067
      %1404 = vmatprep.subr.bf16.mxu0 0
      %1405 = vmatpush1.bf16.msra.mxu0 %v1068
      %1406 = vmatprep.subr.bf16.mxu0 0
      %1407 = vmatpush1.bf16.msra.mxu0 %v1069
      %1408 = vmatprep.subr.bf16.mxu0 0
      %1409 = vmatpush1.bf16.msra.mxu0 %v1070
      %1410 = vmatprep.subr.bf16.mxu0 0
      %1411 = vmatpush1.bf16.msra.mxu0 %v1071
      %1412 = vmatprep.subr.bf16.mxu0 0
      %1413 = vmatpush1.bf16.msra.mxu0 %v1072
      %1414 = vmatprep.subr.bf16.mxu0 0
      %1415 = vmatpush1.bf16.msra.mxu0 %v1073
      %1416 = vmatprep.subr.bf16.mxu0 0
      %1417 = vmatpush1.bf16.msra.mxu0 %v1074
      %1418 = vmatprep.subr.bf16.mxu0 0
      %1419 = vmatpush1.bf16.msra.mxu0 %v1075
      %1420 = vmatprep.subr.bf16.mxu0 0
      %1421 = vmatpush1.bf16.msra.mxu0 %v1076
      %1422 = vmatprep.subr.bf16.mxu0 0
      %1423 = vmatpush1.bf16.msra.mxu0 %v1077
      %1424 = vmatprep.subr.bf16.mxu0 0
      %1425 = vmatpush1.bf16.msra.mxu0 %v1078
      %1426 = vmatprep.mubr.bf16.mxu0 %v478
      %1427 = vmatmul.mubr.bf16.gmra.mrb[0].mxu0 %v477
      %v1428 = vpop.f32.mrb[0].mxu0
      %v1429 = vadd.f32 %v1388, %v1428
      %v1430 = vpop.f32.mrb[0].mxu0
      %v1431 = vpop.f32.mrb[0].mxu0
      %v1432 = vadd.f32 %v1391, %v1431
      %v1433 = vpop.f32.mrb[0].mxu0
      %1434 = vdwg.mxu0
      %1435 = vmatprep.subr.bf16.mxu0 0
      %1436 = vmatpush1.bf16.msra.mxu0 %v1079
      %1437 = vmatprep.subr.bf16.mxu0 0
      %1438 = vmatpush1.bf16.msra.mxu0 %v1080
      %1439 = vmatprep.subr.bf16.mxu0 0
      %1440 = vmatpush1.bf16.msra.mxu0 %v1081
      %1441 = vmatprep.subr.bf16.mxu0 0
      %1442 = vmatpush1.bf16.msra.mxu0 %v1082
      %1443 = vmatprep.subr.bf16.mxu0 0
      %1444 = vmatpush1.bf16.msra.mxu0 %v1083
      %1445 = vmatprep.subr.bf16.mxu0 0
      %1446 = vmatpush1.bf16.msra.mxu0 %v1084
      %1447 = vmatprep.subr.bf16.mxu0 0
      %1448 = vmatpush1.bf16.msra.mxu0 %v1085
      %1449 = vmatprep.subr.bf16.mxu0 0
      %1450 = vmatpush1.bf16.msra.mxu0 %v1086
      %1451 = vmatprep.subr.bf16.mxu0 0
      %1452 = vmatpush1.bf16.msra.mxu0 %v1087
      %1453 = vmatprep.subr.bf16.mxu0 0
      %1454 = vmatpush1.bf16.msra.mxu0 %v1088
      %1455 = vmatprep.subr.bf16.mxu0 0
      %1456 = vmatpush1.bf16.msra.mxu0 %v1089
      %1457 = vmatprep.subr.bf16.mxu0 0
      %1458 = vmatpush1.bf16.msra.mxu0 %v1090
      %1459 = vmatprep.subr.bf16.mxu0 0
      %1460 = vmatpush1.bf16.msra.mxu0 %v1091
      %1461 = vmatprep.subr.bf16.mxu0 0
      %1462 = vmatpush1.bf16.msra.mxu0 %v1092
      %1463 = vmatprep.subr.bf16.mxu0 0
      %1464 = vmatpush1.bf16.msra.mxu0 %v1093
      %1465 = vmatprep.subr.bf16.mxu0 0
      %1466 = vmatpush1.bf16.msra.mxu0 %v1094
      %1467 = vmatprep.mubr.bf16.mxu0 %v480
      %1468 = vmatmul.mubr.bf16.gmra.mrb[0].mxu0 %v479
      %v1469 = vpop.f32.mrb[0].mxu0
      %v1470 = vadd.f32 %v1429, %v1469
      %v1471 = vpop.f32.mrb[0].mxu0
      %v1472 = vpop.f32.mrb[0].mxu0
      %v1473 = vadd.f32 %v1432, %v1472
      %v1474 = vpop.f32.mrb[0].mxu0
      %1475 = vdwg.mxu0
      %1476 = vmatprep.subr.bf16.mxu0 0
      %1477 = vmatpush1.bf16.msra.mxu0 %v1095
      %1478 = vmatprep.subr.bf16.mxu0 0
      %1479 = vmatpush1.bf16.msra.mxu0 %v1096
      %1480 = vmatprep.subr.bf16.mxu0 0
      %1481 = vmatpush1.bf16.msra.mxu0 %v1097
      %1482 = vmatprep.subr.bf16.mxu0 0
      %1483 = vmatpush1.bf16.msra.mxu0 %v1098
      %1484 = vmatprep.subr.bf16.mxu0 0
      %1485 = vmatpush1.bf16.msra.mxu0 %v1099
      %1486 = vmatprep.subr.bf16.mxu0 0
      %1487 = vmatpush1.bf16.msra.mxu0 %v1100
      %1488 = vmatprep.subr.bf16.mxu0 0
      %1489 = vmatpush1.bf16.msra.mxu0 %v1101
      %1490 = vmatprep.subr.bf16.mxu0 0
      %1491 = vmatpush1.bf16.msra.mxu0 %v1102
      %1492 = vmatprep.subr.bf16.mxu0 0
      %1493 = vmatpush1.bf16.msra.mxu0 %v1103
      %1494 = vmatprep.subr.bf16.mxu0 0
      %1495 = vmatpush1.bf16.msra.mxu0 %v1104
      %1496 = vmatprep.subr.bf16.mxu0 0
      %1497 = vmatpush1.bf16.msra.mxu0 %v1105
      %1498 = vmatprep.subr.bf16.mxu0 0
      %1499 = vmatpush1.bf16.msra.mxu0 %v1106
      %1500 = vmatprep.subr.bf16.mxu0 0
      %1501 = vmatpush1.bf16.msra.mxu0 %v1107
      %1502 = vmatprep.subr.bf16.mxu0 0
      %1503 = vmatpush1.bf16.msra.mxu0 %v1108
      %1504 = vmatprep.subr.bf16.mxu0 0
      %1505 = vmatpush1.bf16.msra.mxu0 %v1109
      %1506 = vmatprep.subr.bf16.mxu0 0
      %1507 = vmatpush1.bf16.msra.mxu0 %v1110
      %1508 = vmatprep.mubr.bf16.mxu0 %v482
      %1509 = vmatmul.mubr.bf16.gmra.mrb[0].mxu0 %v481
      %v1510 = vpop.f32.mrb[0].mxu0
      %v1511 = vadd.f32 %v1470, %v1510
      %v1512 = vpop.f32.mrb[0].mxu0
      %v1513 = vpop.f32.mrb[0].mxu0
      %v1514 = vadd.f32 %v1473, %v1513
      %v1515 = vpop.f32.mrb[0].mxu0
      %1516 = vdwg.mxu0
      %1517 = vmatprep.subr.bf16.mxu0 0
      %1518 = vmatpush1.bf16.msra.mxu0 %v1111
      %1519 = vmatprep.subr.bf16.mxu0 0
      %1520 = vmatpush1.bf16.msra.mxu0 %v1112
      %1521 = vmatprep.subr.bf16.mxu0 0
      %1522 = vmatpush1.bf16.msra.mxu0 %v1113
      %1523 = vmatprep.subr.bf16.mxu0 0
      %1524 = vmatpush1.bf16.msra.mxu0 %v1114
      %1525 = vmatprep.subr.bf16.mxu0 0
      %1526 = vmatpush1.bf16.msra.mxu0 %v1115
      %1527 = vmatprep.subr.bf16.mxu0 0
      %1528 = vmatpush1.bf16.msra.mxu0 %v1116
      %1529 = vmatprep.subr.bf16.mxu0 0
      %1530 = vmatpush1.bf16.msra.mxu0 %v1117
      %1531 = vmatprep.subr.bf16.mxu0 0
      %1532 = vmatpush1.bf16.msra.mxu0 %v1118
      %1533 = vmatprep.subr.bf16.mxu0 0
      %1534 = vmatpush1.bf16.msra.mxu0 %v1119
      %1535 = vmatprep.subr.bf16.mxu0 0
      %1536 = vmatpush1.bf16.msra.mxu0 %v1120
      %1537 = vmatprep.subr.bf16.mxu0 0
      %1538 = vmatpush1.bf16.msra.mxu0 %v1121
      %1539 = vmatprep.subr.bf16.mxu0 0
      %1540 = vmatpush1.bf16.msra.mxu0 %v1122
      %1541 = vmatprep.subr.bf16.mxu0 0
      %1542 = vmatpush1.bf16.msra.mxu0 %v1123
      %1543 = vmatprep.subr.bf16.mxu0 0
      %1544 = vmatpush1.bf16.msra.mxu0 %v1124
      %1545 = vmatprep.subr.bf16.mxu0 0
      %1546 = vmatpush1.bf16.msra.mxu0 %v1125
      %1547 = vmatprep.subr.bf16.mxu0 0
      %1548 = vmatpush1.bf16.msra.mxu0 %v1126
      %1549 = vmatprep.mubr.bf16.mxu0 %v484
      %1550 = vmatmul.mubr.bf16.gmra.mrb[0].mxu0 %v483
      %v1551 = vpop.f32.mrb[0].mxu0
      %v1552 = vadd.f32 %v1511, %v1551
      %v1553 = vpop.f32.mrb[0].mxu0
      %v1554 = vpop.f32.mrb[0].mxu0
      %v1555 = vadd.f32 %v1514, %v1554
      %v1556 = vpop.f32.mrb[0].mxu0
      %1557 = vdwg.mxu0
      %1558 = vmatprep.subr.bf16.mxu0 0
      %1559 = vmatpush1.bf16.msra.mxu0 %v1127
      %1560 = vmatprep.subr.bf16.mxu0 0
      %1561 = vmatpush1.bf16.msra.mxu0 %v1128
      %1562 = vmatprep.subr.bf16.mxu0 0
      %1563 = vmatpush1.bf16.msra.mxu0 %v1129
      %1564 = vmatprep.subr.bf16.mxu0 0
      %1565 = vmatpush1.bf16.msra.mxu0 %v1130
      %1566 = vmatprep.subr.bf16.mxu0 0
      %1567 = vmatpush1.bf16.msra.mxu0 %v1131
      %1568 = vmatprep.subr.bf16.mxu0 0
      %1569 = vmatpush1.bf16.msra.mxu0 %v1132
      %1570 = vmatprep.subr.bf16.mxu0 0
      %1571 = vmatpush1.bf16.msra.mxu0 %v1133
      %1572 = vmatprep.subr.bf16.mxu0 0
      %1573 = vmatpush1.bf16.msra.mxu0 %v1134
      %1574 = vmatprep.subr.bf16.mxu0 0
      %1575 = vmatpush1.bf16.msra.mxu0 %v1135
      %1576 = vmatprep.subr.bf16.mxu0 0
      %1577 = vmatpush1.bf16.msra.mxu0 %v1136
      %1578 = vmatprep.subr.bf16.mxu0 0
      %1579 = vmatpush1.bf16.msra.mxu0 %v1137
      %1580 = vmatprep.subr.bf16.mxu0 0
      %1581 = vmatpush1.bf16.msra.mxu0 %v1138
      %1582 = vmatprep.subr.bf16.mxu0 0
      %1583 = vmatpush1.bf16.msra.mxu0 %v1139
      %1584 = vmatprep.subr.bf16.mxu0 0
      %1585 = vmatpush1.bf16.msra.mxu0 %v1140
      %1586 = vmatprep.subr.bf16.mxu0 0
      %1587 = vmatpush1.bf16.msra.mxu0 %v1141
      %1588 = vmatprep.subr.bf16.mxu0 0
      %1589 = vmatpush1.bf16.msra.mxu0 %v1142
      %1590 = vmatprep.mubr.bf16.mxu0 %v486
      %1591 = vmatmul.mubr.bf16.gmra.mrb[0].mxu0 %v485
      %v1592 = vpop.f32.mrb[0].mxu0
      %v1593 = vadd.f32 %v1552, %v1592
      %v1594 = vpop.f32.mrb[0].mxu0
      %v1595 = vpop.f32.mrb[0].mxu0
      %v1596 = vadd.f32 %v1555, %v1595
      %v1597 = vpop.f32.mrb[0].mxu0
      %1598 = vdwg.mxu0
      %1599 = vst [vmem:[%s148] sm:$0xff] %v1593
      %1600 = vst [vmem:[%s148 + $0x8] sm:$0xff] %v1596
      %s1601 = smul.u32 2, %s13
      %p1602 = scmp.lt.s32.totalorder %s1601, 15
      %s1603 = scalar_select %p1602, %s1601, 15
      %s1604 = smul.addr %s1603, 8
      %s1605 = scalar_lea.vmem %s2, %s1604
      // Predicated region
      $region29: #{ccnn_forward.1} parent=27 // pred_check
        %p1606 = pneg %p78
      $region30: #{ccnn_forward.1} parent=27 // pred_check_branch
        %1608 = sbr.rel (%p1606) target = $region32
      $region31: #{ccnn_forward.1} parent=27 // pred_region
        %s1609 = smul.u32 2, %s13
      $region32: #{ccnn_forward.1} parent=27 // pred_fallthru
        _
    $region28: #{ccnn_forward.1} parent=5 // pred_fallthru
      _
    %p1610 = scmp.le.s32.totalorder 2, %s8
    // Predicated region
    $region33: #{ccnn_forward.1} parent=5 // pred_check
      %p1611 = pneg %p1610
    $region34: #{ccnn_forward.1} parent=5 // pred_check_branch
      %1613 = sbr.rel (%p1611) target = $region36
    $region35: #{ccnn_forward.1} parent=5 // pred_region
      %s1614 = ssub.s32 %s8, 2
      // Predicated region
      $region37: #{ccnn_forward.1} parent=35 // pred_check
        %p1615 = pneg %p84
      $region38: #{ccnn_forward.1} parent=35 // pred_check_branch
        %1617 = sbr.rel (%p1615) target = $region40
      $region39: #{ccnn_forward.1} parent=35 // pred_region
        %s1618 = smul.u32 2, %s14
        %p1619 = scmp.lt.s32.totalorder %s1618, 15
        %s1620 = scalar_select %p1619, %s1618, 15
        %s1621 = smul.addr %s1620, 8
        %s1622 = scalar_lea.vmem %s2, %s1621
      $region40: #{ccnn_forward.1} parent=35 // pred_fallthru
        _
    $region36: #{ccnn_forward.1} parent=5 // pred_fallthru
      _
  $region6: #{ccnn_forward.1} parent=0 // loop_footer
    %s12 = sadd.s32 1, %s8
  $region7: #{ccnn_forward.1} parent=0 // loop_footer_branch
    %7 = sbr.rel target = $region3
  $region8: #{ccnn_forward.1} parent=0 // loop_exit
    _

// kernel: custom-call.2
$region0: #{custom-call.2}
  %s0 = inlined_call_operand.vmem [shape: f32[2,8,8,8,8], index: 0, kind: input, shape index: {}]
  %s1 = inlined_call_operand.vmem [shape: f32[2,8,8,8,8], index: 1, kind: input, shape index: {}]
  %s2 = inlined_call_operand.vmem [shape: c64[2,8,8,8,8], index: 2, kind: output, shape index: {}]
  %s4 = scalar_lea.vmem %s2, 1024
  %v5 = vld [vmem:[%s0] sm:$0xff]
  %6 = vst [vmem:[%s2] sm:$0xff] %v5
  %s7 = scalar_lea.vmem %s2, 8
  %s8 = scalar_lea.vmem %s0, 8
  %v9 = vld [vmem:[%s8] sm:$0xff]
  %10 = vst [vmem:[%s7] sm:$0xff] %v9
  %s11 = scalar_lea.vmem %s2, 16
  %s12 = scalar_lea.vmem %s0, 16
  %v13 = vld [vmem:[%s12] sm:$0xff]
  %14 = vst [vmem:[%s11] sm:$0xff] %v13
  %s15 = scalar_lea.vmem %s2, 24
  %s16 = scalar_lea.vmem %s0, 24
  %v17 = vld [vmem:[%s16] sm:$0xff]
  %18 = vst [vmem:[%s15] sm:$0xff] %v17
  %s19 = scalar_lea.vmem %s2, 32
  %s20 = scalar_lea.vmem %s0, 32
  %v21 = vld [vmem:[%s20] sm:$0xff]
  %22 = vst [vmem:[%s19] sm:$0xff] %v21
  %s23 = scalar_lea.vmem %s2, 40
  %s24 = scalar_lea.vmem %s0, 40
  %v25 = vld [vmem:[%s24] sm:$0xff]
  %26 = vst [vmem:[%s23] sm:$0xff] %v25
  %s27 = scalar_lea.vmem %s2, 48
  %s28 = scalar_lea.vmem %s0, 48
  %v29 = vld [vmem:[%s28] sm:$0xff]
  %30 = vst [vmem:[%s27] sm:$0xff] %v29
  %s31 = scalar_lea.vmem %s2, 56
  %s32 = scalar_lea.vmem %s0, 56
  %v33 = vld [vmem:[%s32] sm:$0xff]
  %34 = vst [vmem:[%s31] sm:$0xff] %v33
  %s35 = scalar_lea.vmem %s2, 64
  %s36 = scalar_lea.vmem %s0, 64
  %v37 = vld [vmem:[%s36] sm:$0xff]
  %38 = vst [vmem:[%s35] sm:$0xff] %v37
  %s39 = scalar_lea.vmem %s2, 72
  %s40 = scalar_lea.vmem %s0, 72
  %v41 = vld [vmem:[%s40] sm:$0xff]
  %42 = vst [vmem:[%s39] sm:$0xff] %v41
  %s43 = scalar_lea.vmem %s2, 80
  %s44 = scalar_lea.vmem %s0, 80
  %v45 = vld [vmem:[%s44] sm:$0xff]
  %46 = vst [vmem:[%s43] sm:$0xff] %v45
  %s47 = scalar_lea.vmem %s2, 88
  %s48 = scalar_lea.vmem %s0, 88
  %v49 = vld [vmem:[%s48] sm:$0xff]
  %50 = vst [vmem:[%s47] sm:$0xff] %v49
  %s51 = scalar_lea.vmem %s2, 96
  %s52 = scalar_lea.vmem %s0, 96
  %v53 = vld [vmem:[%s52] sm:$0xff]
  %54 = vst [vmem:[%s51] sm:$0xff] %v53
  %s55 = scalar_lea.vmem %s2, 104
  %s56 = scalar_lea.vmem %s0, 104
  %v57 = vld [vmem:[%s56] sm:$0xff]
  %58 = vst [vmem:[%s55] sm:$0xff] %v57
  %s59 = scalar_lea.vmem %s2, 112
  %s60 = scalar_lea.vmem %s0, 112
  %v61 = vld [vmem:[%s60] sm:$0xff]
  %62 = vst [vmem:[%s59] sm:$0xff] %v61
  %s63 = scalar_lea.vmem %s2, 120
  %s64 = scalar_lea.vmem %s0, 120
  %v65 = vld [vmem:[%s64] sm:$0xff]
  %66 = vst [vmem:[%s63] sm:$0xff] %v65
  %s67 = scalar_lea.vmem %s2, 128
  %s68 = scalar_lea.vmem %s0, 128
  %v69 = vld [vmem:[%s68] sm:$0xff]
  %70 = vst [vmem:[%s67] sm:$0xff] %v69
  %s71 = scalar_lea.vmem %s2, 136
  %s72 = scalar_lea.vmem %s0, 136
  %v73 = vld [vmem:[%s72] sm:$0xff]
  %74 = vst [vmem:[%s71] sm:$0xff] %v73
  %s75 = scalar_lea.vmem %s2, 144
  %s76 = scalar_lea.vmem %s0, 144
  %v77 = vld [vmem:[%s76] sm:$0xff]
  %78 = vst [vmem:[%s75] sm:$0xff] %v77
  %s79 = scalar_lea.vmem %s2, 152
  %s80 = scalar_lea.vmem %s0, 152
  %v81 = vld [vmem:[%s80] sm:$0xff]
  %82 = vst [vmem:[%s79] sm:$0xff] %v81
  %s83 = scalar_lea.vmem %s2, 160
  %s84 = scalar_lea.vmem %s0, 160
  %v85 = vld [vmem:[%s84] sm:$0xff]
  %86 = vst [vmem:[%s83] sm:$0xff] %v85
  %s87 = scalar_lea.vmem %s2, 168
  %s88 = scalar_lea.vmem %s0, 168
  %v89 = vld [vmem:[%s88] sm:$0xff]
  %90 = vst [vmem:[%s87] sm:$0xff] %v89
  %s91 = scalar_lea.vmem %s2, 176
  %s92 = scalar_lea.vmem %s0, 176
  %v93 = vld [vmem:[%s92] sm:$0xff]
  %94 = vst [vmem:[%s91] sm:$0xff] %v93
  %s95 = scalar_lea.vmem %s2, 184
  %s96 = scalar_lea.vmem %s0, 184
  %v97 = vld [vmem:[%s96] sm:$0xff]
  %98 = vst [vmem:[%s95] sm:$0xff] %v97
  %s99 = scalar_lea.vmem %s2, 192
  %s100 = scalar_lea.vmem %s0, 192
  %v101 = vld [vmem:[%s100] sm:$0xff]
  %102 = vst [vmem:[%s99] sm:$0xff] %v101
  %s103 = scalar_lea.vmem %s2, 200
  %s104 = scalar_lea.vmem %s0, 200
  %v105 = vld [vmem:[%s104] sm:$0xff]
  %106 = vst [vmem:[%s103] sm:$0xff] %v105
  %s107 = scalar_lea.vmem %s2, 208
  %s108 = scalar_lea.vmem %s0, 208
  %v109 = vld [vmem:[%s108] sm:$0xff]
  %110 = vst [vmem:[%s107] sm:$0xff] %v109
  %s111 = scalar_lea.vmem %s2, 216
  %s112 = scalar_lea.vmem %s0, 216
  %v113 = vld [vmem:[%s112] sm:$0xff]
  %114 = vst [vmem:[%s111] sm:$0xff] %v113
  %s115 = scalar_lea.vmem %s2, 224
  %s116 = scalar_lea.vmem %s0, 224
  %v117 = vld [vmem:[%s116] sm:$0xff]
  %118 = vst [vmem:[%s115] sm:$0xff] %v117
  %s119 = scalar_lea.vmem %s2, 232
  %s120 = scalar_lea.vmem %s0, 232
  %v121 = vld [vmem:[%s120] sm:$0xff]
  %122 = vst [vmem:[%s119] sm:$0xff] %v121
  %s123 = scalar_lea.vmem %s2, 240
  %s124 = scalar_lea.vmem %s0, 240
  %v125 = vld [vmem:[%s124] sm:$0xff]
  %126 = vst [vmem:[%s123] sm:$0xff] %v125
  %s127 = scalar_lea.vmem %s2, 248
  %s128 = scalar_lea.vmem %s0, 248
  %v129 = vld [vmem:[%s128] sm:$0xff]
  %130 = vst [vmem:[%s127] sm:$0xff] %v129
  %s131 = scalar_lea.vmem %s2, 256
  %s132 = scalar_lea.vmem %s0, 256
  %v133 = vld [vmem:[%s132] sm:$0xff]
  %134 = vst [vmem:[%s131] sm:$0xff] %v133
  %s135 = scalar_lea.vmem %s2, 264
  %s136 = scalar_lea.vmem %s0, 264
  %v137 = vld [vmem:[%s136] sm:$0xff]
  %138 = vst [vmem:[%s135] sm:$0xff] %v137
  %s139 = scalar_lea.vmem %s2, 272
  %s140 = scalar_lea.vmem %s0, 272
  %v141 = vld [vmem:[%s140] sm:$0xff]
  %142 = vst [vmem:[%s139] sm:$0xff] %v141
  %s143 = scalar_lea.vmem %s2, 280
  %s144 = scalar_lea.vmem %s0, 280
  %v145 = vld [vmem:[%s144] sm:$0xff]
  %146 = vst [vmem:[%s143] sm:$0xff] %v145
  %s147 = scalar_lea.vmem %s2, 288
  %s148 = scalar_lea.vmem %s0, 288
  %v149 = vld [vmem:[%s148] sm:$0xff]
  %150 = vst [vmem:[%s147] sm:$0xff] %v149
  %s151 = scalar_lea.vmem %s2, 296
  %s152 = scalar_lea.vmem %s0, 296
  %v153 = vld [vmem:[%s152] sm:$0xff]
  %154 = vst [vmem:[%s151] sm:$0xff] %v153
  %s155 = scalar_lea.vmem %s2, 304
  %s156 = scalar_lea.vmem %s0, 304
  %v157 = vld [vmem:[%s156] sm:$0xff]
  %158 = vst [vmem:[%s155] sm:$0xff] %v157
  %s159 = scalar_lea.vmem %s2, 312
  %s160 = scalar_lea.vmem %s0, 312
  %v161 = vld [vmem:[%s160] sm:$0xff]
  %162 = vst [vmem:[%s159] sm:$0xff] %v161
  %s163 = scalar_lea.vmem %s2, 320
  %s164 = scalar_lea.vmem %s0, 320
  %v165 = vld [vmem:[%s164] sm:$0xff]
  %166 = vst [vmem:[%s163] sm:$0xff] %v165
  %s167 = scalar_lea.vmem %s2, 328
  %s168 = scalar_lea.vmem %s0, 328
  %v169 = vld [vmem:[%s168] sm:$0xff]
  %170 = vst [vmem:[%s167] sm:$0xff] %v169
  %s171 = scalar_lea.vmem %s2, 336
  %s172 = scalar_lea.vmem %s0, 336
  %v173 = vld [vmem:[%s172] sm:$0xff]
  %174 = vst [vmem:[%s171] sm:$0xff] %v173
  %s175 = scalar_lea.vmem %s2, 344
  %s176 = scalar_lea.vmem %s0, 344
  %v177 = vld [vmem:[%s176] sm:$0xff]
  %178 = vst [vmem:[%s175] sm:$0xff] %v177
  %s179 = scalar_lea.vmem %s2, 352
  %s180 = scalar_lea.vmem %s0, 352
  %v181 = vld [vmem:[%s180] sm:$0xff]
  %182 = vst [vmem:[%s179] sm:$0xff] %v181
  %s183 = scalar_lea.vmem %s2, 360
  %s184 = scalar_lea.vmem %s0, 360
  %v185 = vld [vmem:[%s184] sm:$0xff]
  %186 = vst [vmem:[%s183] sm:$0xff] %v185
  %s187 = scalar_lea.vmem %s2, 368
  %s188 = scalar_lea.vmem %s0, 368
  %v189 = vld [vmem:[%s188] sm:$0xff]
  %190 = vst [vmem:[%s187] sm:$0xff] %v189
  %s191 = scalar_lea.vmem %s2, 376
  %s192 = scalar_lea.vmem %s0, 376
  %v193 = vld [vmem:[%s192] sm:$0xff]
  %194 = vst [vmem:[%s191] sm:$0xff] %v193
  %s195 = scalar_lea.vmem %s2, 384
  %s196 = scalar_lea.vmem %s0, 384
  %v197 = vld [vmem:[%s196] sm:$0xff]
  %198 = vst [vmem:[%s195] sm:$0xff] %v197
  %s199 = scalar_lea.vmem %s2, 392
  %s200 = scalar_lea.vmem %s0, 392
  %v201 = vld [vmem:[%s200] sm:$0xff]
  %202 = vst [vmem:[%s199] sm:$0xff] %v201
  %s203 = scalar_lea.vmem %s2, 400
  %s204 = scalar_lea.vmem %s0, 400
  %v205 = vld [vmem:[%s204] sm:$0xff]
  %206 = vst [vmem:[%s203] sm:$0xff] %v205
  %s207 = scalar_lea.vmem %s2, 408
  %s208 = scalar_lea.vmem %s0, 408
  %v209 = vld [vmem:[%s208] sm:$0xff]
  %210 = vst [vmem:[%s207] sm:$0xff] %v209
  %s211 = scalar_lea.vmem %s2, 416
  %s212 = scalar_lea.vmem %s0, 416
  %v213 = vld [vmem:[%s212] sm:$0xff]
  %214 = vst [vmem:[%s211] sm:$0xff] %v213
  %s215 = scalar_lea.vmem %s2, 424
  %s216 = scalar_lea.vmem %s0, 424
  %v217 = vld [vmem:[%s216] sm:$0xff]
  %218 = vst [vmem:[%s215] sm:$0xff] %v217
  %s219 = scalar_lea.vmem %s2, 432
  %s220 = scalar_lea.vmem %s0, 432
  %v221 = vld [vmem:[%s220] sm:$0xff]
  %222 = vst [vmem:[%s219] sm:$0xff] %v221
  %s223 = scalar_lea.vmem %s2, 440
  %s224 = scalar_lea.vmem %s0, 440
  %v225 = vld [vmem:[%s224] sm:$0xff]
  %226 = vst [vmem:[%s223] sm:$0xff] %v225
  %s227 = scalar_lea.vmem %s2, 448
  %s228 = scalar_lea.vmem %s0, 448
  %v229 = vld [vmem:[%s228] sm:$0xff]
  %230 = vst [vmem:[%s227] sm:$0xff] %v229
  %s231 = scalar_lea.vmem %s2, 456
  %s232 = scalar_lea.vmem %s0, 456
  %v233 = vld [vmem:[%s232] sm:$0xff]
  %234 = vst [vmem:[%s231] sm:$0xff] %v233
  %s235 = scalar_lea.vmem %s2, 464
  %s236 = scalar_lea.vmem %s0, 464
  %v237 = vld [vmem:[%s236] sm:$0xff]
  %238 = vst [vmem:[%s235] sm:$0xff] %v237
  %s239 = scalar_lea.vmem %s2, 472
  %s240 = scalar_lea.vmem %s0, 472
  %v241 = vld [vmem:[%s240] sm:$0xff]
  %242 = vst [vmem:[%s239] sm:$0xff] %v241
  %s243 = scalar_lea.vmem %s2, 480
  %s244 = scalar_lea.vmem %s0, 480
  %v245 = vld [vmem:[%s244] sm:$0xff]
  %246 = vst [vmem:[%s243] sm:$0xff] %v245
  %s247 = scalar_lea.vmem %s2, 488
  %s248 = scalar_lea.vmem %s0, 488
  %v249 = vld [vmem:[%s248] sm:$0xff]
  %250 = vst [vmem:[%s247] sm:$0xff] %v249
  %s251 = scalar_lea.vmem %s2, 496
  %s252 = scalar_lea.vmem %s0, 496
  %v253 = vld [vmem:[%s252] sm:$0xff]
  %254 = vst [vmem:[%s251] sm:$0xff] %v253
  %s255 = scalar_lea.vmem %s2, 504
  %s256 = scalar_lea.vmem %s0, 504
  %v257 = vld [vmem:[%s256] sm:$0xff]
  %258 = vst [vmem:[%s255] sm:$0xff] %v257
  %s259 = scalar_lea.vmem %s2, 512
  %s260 = scalar_lea.vmem %s0, 512
  %v261 = vld [vmem:[%s260] sm:$0xff]
  %262 = vst [vmem:[%s259] sm:$0xff] %v261
  %s263 = scalar_lea.vmem %s2, 520
  %s264 = scalar_lea.vmem %s0, 520
  %v265 = vld [vmem:[%s264] sm:$0xff]
  %266 = vst [vmem:[%s263] sm:$0xff] %v265
  %s267 = scalar_lea.vmem %s2, 528
  %s268 = scalar_lea.vmem %s0, 528
  %v269 = vld [vmem:[%s268] sm:$0xff]
  %270 = vst [vmem:[%s267] sm:$0xff] %v269
  %s271 = scalar_lea.vmem %s2, 536
  %s272 = scalar_lea.vmem %s0, 536
  %v273 = vld [vmem:[%s272] sm:$0xff]
  %274 = vst [vmem:[%s271] sm:$0xff] %v273
  %s275 = scalar_lea.vmem %s2, 544
  %s276 = scalar_lea.vmem %s0, 544
  %v277 = vld [vmem:[%s276] sm:$0xff]
  %278 = vst [vmem:[%s275] sm:$0xff] %v277
  %s279 = scalar_lea.vmem %s2, 552
  %s280 = scalar_lea.vmem %s0, 552
  %v281 = vld [vmem:[%s280] sm:$0xff]
  %282 = vst [vmem:[%s279] sm:$0xff] %v281
  %s283 = scalar_lea.vmem %s2, 560
  %s284 = scalar_lea.vmem %s0, 560
  %v285 = vld [vmem:[%s284] sm:$0xff]
  %286 = vst [vmem:[%s283] sm:$0xff] %v285
  %s287 = scalar_lea.vmem %s2, 568
  %s288 = scalar_lea.vmem %s0, 568
  %v289 = vld [vmem:[%s288] sm:$0xff]
  %290 = vst [vmem:[%s287] sm:$0xff] %v289
  %s291 = scalar_lea.vmem %s2, 576
  %s292 = scalar_lea.vmem %s0, 576
  %v293 = vld [vmem:[%s292] sm:$0xff]
  %294 = vst [vmem:[%s291] sm:$0xff] %v293
  %s295 = scalar_lea.vmem %s2, 584
  %s296 = scalar_lea.vmem %s0, 584
  %v297 = vld [vmem:[%s296] sm:$0xff]
  %298 = vst [vmem:[%s295] sm:$0xff] %v297
  %s299 = scalar_lea.vmem %s2, 592
  %s300 = scalar_lea.vmem %s0, 592
  %v301 = vld [vmem:[%s300] sm:$0xff]
  %302 = vst [vmem:[%s299] sm:$0xff] %v301
  %s303 = scalar_lea.vmem %s2, 600
  %s304 = scalar_lea.vmem %s0, 600
  %v305 = vld [vmem:[%s304] sm:$0xff]
  %306 = vst [vmem:[%s303] sm:$0xff] %v305
  %s307 = scalar_lea.vmem %s2, 608
  %s308 = scalar_lea.vmem %s0, 608
  %v309 = vld [vmem:[%s308] sm:$0xff]
  %310 = vst [vmem:[%s307] sm:$0xff] %v309
  %s311 = scalar_lea.vmem %s2, 616
  %s312 = scalar_lea.vmem %s0, 616
  %v313 = vld [vmem:[%s312] sm:$0xff]
  %314 = vst [vmem:[%s311] sm:$0xff] %v313
  %s315 = scalar_lea.vmem %s2, 624
  %s316 = scalar_lea.vmem %s0, 624
  %v317 = vld [vmem:[%s316] sm:$0xff]
  %318 = vst [vmem:[%s315] sm:$0xff] %v317
  %s319 = scalar_lea.vmem %s2, 632
  %s320 = scalar_lea.vmem %s0, 632
  %v321 = vld [vmem:[%s320] sm:$0xff]
  %322 = vst [vmem:[%s319] sm:$0xff] %v321
  %s323 = scalar_lea.vmem %s2, 640
  %s324 = scalar_lea.vmem %s0, 640
  %v325 = vld [vmem:[%s324] sm:$0xff]
  %326 = vst [vmem:[%s323] sm:$0xff] %v325
  %s327 = scalar_lea.vmem %s2, 648
  %s328 = scalar_lea.vmem %s0, 648
  %v329 = vld [vmem:[%s328] sm:$0xff]
  %330 = vst [vmem:[%s327] sm:$0xff] %v329
  %s331 = scalar_lea.vmem %s2, 656
  %s332 = scalar_lea.vmem %s0, 656
  %v333 = vld [vmem:[%s332] sm:$0xff]
  %334 = vst [vmem:[%s331] sm:$0xff] %v333
  %s335 = scalar_lea.vmem %s2, 664
  %s336 = scalar_lea.vmem %s0, 664
  %v337 = vld [vmem:[%s336] sm:$0xff]
  %338 = vst [vmem:[%s335] sm:$0xff] %v337
  %s339 = scalar_lea.vmem %s2, 672
  %s340 = scalar_lea.vmem %s0, 672
  %v341 = vld [vmem:[%s340] sm:$0xff]
  %342 = vst [vmem:[%s339] sm:$0xff] %v341
  %s343 = scalar_lea.vmem %s2, 680
  %s344 = scalar_lea.vmem %s0, 680
  %v345 = vld [vmem:[%s344] sm:$0xff]
  %346 = vst [vmem:[%s343] sm:$0xff] %v345
  %s347 = scalar_lea.vmem %s2, 688
  %s348 = scalar_lea.vmem %s0, 688
  %v349 = vld [vmem:[%s348] sm:$0xff]
  %350 = vst [vmem:[%s347] sm:$0xff] %v349
  %s351 = scalar_lea.vmem %s2, 696
  %s352 = scalar_lea.vmem %s0, 696
  %v353 = vld [vmem:[%s352] sm:$0xff]
  %354 = vst [vmem:[%s351] sm:$0xff] %v353
  %s355 = scalar_lea.vmem %s2, 704
  %s356 = scalar_lea.vmem %s0, 704
  %v357 = vld [vmem:[%s356] sm:$0xff]
  %358 = vst [vmem:[%s355] sm:$0xff] %v357
  %s359 = scalar_lea.vmem %s2, 712
  %s360 = scalar_lea.vmem %s0, 712
  %v361 = vld [vmem:[%s360] sm:$0xff]
  %362 = vst [vmem:[%s359] sm:$0xff] %v361
  %s363 = scalar_lea.vmem %s2, 720
  %s364 = scalar_lea.vmem %s0, 720
  %v365 = vld [vmem:[%s364] sm:$0xff]
  %366 = vst [vmem:[%s363] sm:$0xff] %v365
  %s367 = scalar_lea.vmem %s2, 728
  %s368 = scalar_lea.vmem %s0, 728
  %v369 = vld [vmem:[%s368] sm:$0xff]
  %370 = vst [vmem:[%s367] sm:$0xff] %v369
  %s371 = scalar_lea.vmem %s2, 736
  %s372 = scalar_lea.vmem %s0, 736
  %v373 = vld [vmem:[%s372] sm:$0xff]
  %374 = vst [vmem:[%s371] sm:$0xff] %v373
  %s375 = scalar_lea.vmem %s2, 744
  %s376 = scalar_lea.vmem %s0, 744
  %v377 = vld [vmem:[%s376] sm:$0xff]
  %378 = vst [vmem:[%s375] sm:$0xff] %v377
  %s379 = scalar_lea.vmem %s2, 752
  %s380 = scalar_lea.vmem %s0, 752
  %v381 = vld [vmem:[%s380] sm:$0xff]
  %382 = vst [vmem:[%s379] sm:$0xff] %v381
  %s383 = scalar_lea.vmem %s2, 760
  %s384 = scalar_lea.vmem %s0, 760
  %v385 = vld [vmem:[%s384] sm:$0xff]
  %386 = vst [vmem:[%s383] sm:$0xff] %v385
  %s387 = scalar_lea.vmem %s2, 768
  %s388 = scalar_lea.vmem %s0, 768
  %v389 = vld [vmem:[%s388] sm:$0xff]
  %390 = vst [vmem:[%s387] sm:$0xff] %v389
  %s391 = scalar_lea.vmem %s2, 776
  %s392 = scalar_lea.vmem %s0, 776
  %v393 = vld [vmem:[%s392] sm:$0xff]
  %394 = vst [vmem:[%s391] sm:$0xff] %v393
  %s395 = scalar_lea.vmem %s2, 784
  %s396 = scalar_lea.vmem %s0, 784
  %v397 = vld [vmem:[%s396] sm:$0xff]
  %398 = vst [vmem:[%s395] sm:$0xff] %v397
  %s399 = scalar_lea.vmem %s2, 792
  %s400 = scalar_lea.vmem %s0, 792
  %v401 = vld [vmem:[%s400] sm:$0xff]
  %402 = vst [vmem:[%s399] sm:$0xff] %v401
  %s403 = scalar_lea.vmem %s2, 800
  %s404 = scalar_lea.vmem %s0, 800
  %v405 = vld [vmem:[%s404] sm:$0xff]
  %406 = vst [vmem:[%s403] sm:$0xff] %v405
  %s407 = scalar_lea.vmem %s2, 808
  %s408 = scalar_lea.vmem %s0, 808
  %v409 = vld [vmem:[%s408] sm:$0xff]
  %410 = vst [vmem:[%s407] sm:$0xff] %v409
  %s411 = scalar_lea.vmem %s2, 816
  %s412 = scalar_lea.vmem %s0, 816
  %v413 = vld [vmem:[%s412] sm:$0xff]
  %414 = vst [vmem:[%s411] sm:$0xff] %v413
  %s415 = scalar_lea.vmem %s2, 824
  %s416 = scalar_lea.vmem %s0, 824
  %v417 = vld [vmem:[%s416] sm:$0xff]
  %418 = vst [vmem:[%s415] sm:$0xff] %v417
  %s419 = scalar_lea.vmem %s2, 832
  %s420 = scalar_lea.vmem %s0, 832
  %v421 = vld [vmem:[%s420] sm:$0xff]
  %422 = vst [vmem:[%s419] sm:$0xff] %v421
  %s423 = scalar_lea.vmem %s2, 840
  %s424 = scalar_lea.vmem %s0, 840
  %v425 = vld [vmem:[%s424] sm:$0xff]
  %426 = vst [vmem:[%s423] sm:$0xff] %v425
  %s427 = scalar_lea.vmem %s2, 848
  %s428 = scalar_lea.vmem %s0, 848
  %v429 = vld [vmem:[%s428] sm:$0xff]
  %430 = vst [vmem:[%s427] sm:$0xff] %v429
  %s431 = scalar_lea.vmem %s2, 856
  %s432 = scalar_lea.vmem %s0, 856
  %v433 = vld [vmem:[%s432] sm:$0xff]
  %434 = vst [vmem:[%s431] sm:$0xff] %v433
  %s435 = scalar_lea.vmem %s2, 864
  %s436 = scalar_lea.vmem %s0, 864
  %v437 = vld [vmem:[%s436] sm:$0xff]
  %438 = vst [vmem:[%s435] sm:$0xff] %v437
  %s439 = scalar_lea.vmem %s2, 872
  %s440 = scalar_lea.vmem %s0, 872
  %v441 = vld [vmem:[%s440] sm:$0xff]
  %442 = vst [vmem:[%s439] sm:$0xff] %v441
  %s443 = scalar_lea.vmem %s2, 880
  %s444 = scalar_lea.vmem %s0, 880
  %v445 = vld [vmem:[%s444] sm:$0xff]
  %446 = vst [vmem:[%s443] sm:$0xff] %v445
  %s447 = scalar_lea.vmem %s2, 888
  %s448 = scalar_lea.vmem %s0, 888
  %v449 = vld [vmem:[%s448] sm:$0xff]
  %450 = vst [vmem:[%s447] sm:$0xff] %v449
  %s451 = scalar_lea.vmem %s2, 896
  %s452 = scalar_lea.vmem %s0, 896
  %v453 = vld [vmem:[%s452] sm:$0xff]
  %454 = vst [vmem:[%s451] sm:$0xff] %v453
  %s455 = scalar_lea.vmem %s2, 904
  %s456 = scalar_lea.vmem %s0, 904
  %v457 = vld [vmem:[%s456] sm:$0xff]
  %458 = vst [vmem:[%s455] sm:$0xff] %v457
  %s459 = scalar_lea.vmem %s2, 912
  %s460 = scalar_lea.vmem %s0, 912
  %v461 = vld [vmem:[%s460] sm:$0xff]
  %462 = vst [vmem:[%s459] sm:$0xff] %v461
  %s463 = scalar_lea.vmem %s2, 920
  %s464 = scalar_lea.vmem %s0, 920
  %v465 = vld [vmem:[%s464] sm:$0xff]
  %466 = vst [vmem:[%s463] sm:$0xff] %v465
  %s467 = scalar_lea.vmem %s2, 928
  %s468 = scalar_lea.vmem %s0, 928
  %v469 = vld [vmem:[%s468] sm:$0xff]
  %470 = vst [vmem:[%s467] sm:$0xff] %v469
  %s471 = scalar_lea.vmem %s2, 936
  %s472 = scalar_lea.vmem %s0, 936
  %v473 = vld [vmem:[%s472] sm:$0xff]
  %474 = vst [vmem:[%s471] sm:$0xff] %v473
  %s475 = scalar_lea.vmem %s2, 944
  %s476 = scalar_lea.vmem %s0, 944
  %v477 = vld [vmem:[%s476] sm:$0xff]
  %478 = vst [vmem:[%s475] sm:$0xff] %v477
  %s479 = scalar_lea.vmem %s2, 952
  %s480 = scalar_lea.vmem %s0, 952
  %v481 = vld [vmem:[%s480] sm:$0xff]
  %482 = vst [vmem:[%s479] sm:$0xff] %v481
  %s483 = scalar_lea.vmem %s2, 960
  %s484 = scalar_lea.vmem %s0, 960
  %v485 = vld [vmem:[%s484] sm:$0xff]
  %486 = vst [vmem:[%s483] sm:$0xff] %v485
  %s487 = scalar_lea.vmem %s2, 968
  %s488 = scalar_lea.vmem %s0, 968
  %v489 = vld [vmem:[%s488] sm:$0xff]
  %490 = vst [vmem:[%s487] sm:$0xff] %v489
  %s491 = scalar_lea.vmem %s2, 976
  %s492 = scalar_lea.vmem %s0, 976
  %v493 = vld [vmem:[%s492] sm:$0xff]
  %494 = vst [vmem:[%s491] sm:$0xff] %v493
  %s495 = scalar_lea.vmem %s2, 984
  %s496 = scalar_lea.vmem %s0, 984
  %v497 = vld [vmem:[%s496] sm:$0xff]
  %498 = vst [vmem:[%s495] sm:$0xff] %v497
  %s499 = scalar_lea.vmem %s2, 992
  %s500 = scalar_lea.vmem %s0, 992
  %v501 = vld [vmem:[%s500] sm:$0xff]
  %502 = vst [vmem:[%s499] sm:$0xff] %v501
  %s503 = scalar_lea.vmem %s2, 1000
  %s504 = scalar_lea.vmem %s0, 1000
  %v505 = vld [vmem:[%s504] sm:$0xff]
  %506 = vst [vmem:[%s503] sm:$0xff] %v505
  %s507 = scalar_lea.vmem %s2, 1008
  %s508 = scalar_lea.vmem %s0, 1008
  %v509 = vld [vmem:[%s508] sm:$0xff]
  %510 = vst [vmem:[%s507] sm:$0xff] %v509
  %s511 = scalar_lea.vmem %s2, 1016
  %s512 = scalar_lea.vmem %s0, 1016
  %v513 = vld [vmem:[%s512] sm:$0xff]
  %514 = vst [vmem:[%s511] sm:$0xff] %v513
  %v515 = vld [vmem:[%s1] sm:$0xff]
  %516 = vst [vmem:[%s4] sm:$0xff] %v515
  %s517 = scalar_lea.vmem %s4, 8
  %s518 = scalar_lea.vmem %s1, 8
  %v519 = vld [vmem:[%s518] sm:$0xff]
  %520 = vst [vmem:[%s517] sm:$0xff] %v519
  %s521 = scalar_lea.vmem %s4, 16
  %s522 = scalar_lea.vmem %s1, 16
  %v523 = vld [vmem:[%s522] sm:$0xff]
  %524 = vst [vmem:[%s521] sm:$0xff] %v523
  %s525 = scalar_lea.vmem %s4, 24
  %s526 = scalar_lea.vmem %s1, 24
  %v527 = vld [vmem:[%s526] sm:$0xff]
  %528 = vst [vmem:[%s525] sm:$0xff] %v527
  %s529 = scalar_lea.vmem %s4, 32
  %s530 = scalar_lea.vmem %s1, 32
  %v531 = vld [vmem:[%s530] sm:$0xff]
  %532 = vst [vmem:[%s529] sm:$0xff] %v531
  %s533 = scalar_lea.vmem %s4, 40
  %s534 = scalar_lea.vmem %s1, 40
  %v535 = vld [vmem:[%s534] sm:$0xff]
  %536 = vst [vmem:[%s533] sm:$0xff] %v535
  %s537 = scalar_lea.vmem %s4, 48
  %s538 = scalar_lea.vmem %s1, 48
  %v539 = vld [vmem:[%s538] sm:$0xff]
  %540 = vst [vmem:[%s537] sm:$0xff] %v539
  %s541 = scalar_lea.vmem %s4, 56
  %s542 = scalar_lea.vmem %s1, 56
  %v543 = vld [vmem:[%s542] sm:$0xff]
  %544 = vst [vmem:[%s541] sm:$0xff] %v543
  %s545 = scalar_lea.vmem %s4, 64
  %s546 = scalar_lea.vmem %s1, 64
  %v547 = vld [vmem:[%s546] sm:$0xff]
  %548 = vst [vmem:[%s545] sm:$0xff] %v547
  %s549 = scalar_lea.vmem %s4, 72
  %s550 = scalar_lea.vmem %s1, 72
  %v551 = vld [vmem:[%s550] sm:$0xff]
  %552 = vst [vmem:[%s549] sm:$0xff] %v551
  %s553 = scalar_lea.vmem %s4, 80
  %s554 = scalar_lea.vmem %s1, 80
  %v555 = vld [vmem:[%s554] sm:$0xff]
  %556 = vst [vmem:[%s553] sm:$0xff] %v555
  %s557 = scalar_lea.vmem %s4, 88
  %s558 = scalar_lea.vmem %s1, 88
  %v559 = vld [vmem:[%s558] sm:$0xff]
  %560 = vst [vmem:[%s557] sm:$0xff] %v559
  %s561 = scalar_lea.vmem %s4, 96
  %s562 = scalar_lea.vmem %s1, 96
  %v563 = vld [vmem:[%s562] sm:$0xff]
  %564 = vst [vmem:[%s561] sm:$0xff] %v563
  %s565 = scalar_lea.vmem %s4, 104
  %s566 = scalar_lea.vmem %s1, 104
  %v567 = vld [vmem:[%s566] sm:$0xff]
  %568 = vst [vmem:[%s565] sm:$0xff] %v567
  %s569 = scalar_lea.vmem %s4, 112
  %s570 = scalar_lea.vmem %s1, 112
  %v571 = vld [vmem:[%s570] sm:$0xff]
  %572 = vst [vmem:[%s569] sm:$0xff] %v571
  %s573 = scalar_lea.vmem %s4, 120
  %s574 = scalar_lea.vmem %s1, 120
  %v575 = vld [vmem:[%s574] sm:$0xff]
  %576 = vst [vmem:[%s573] sm:$0xff] %v575
  %s577 = scalar_lea.vmem %s4, 128
  %s578 = scalar_lea.vmem %s1, 128
  %v579 = vld [vmem:[%s578] sm:$0xff]
  %580 = vst [vmem:[%s577] sm:$0xff] %v579
  %s581 = scalar_lea.vmem %s4, 136
  %s582 = scalar_lea.vmem %s1, 136
  %v583 = vld [vmem:[%s582] sm:$0xff]
  %584 = vst [vmem:[%s581] sm:$0xff] %v583
  %s585 = scalar_lea.vmem %s4, 144
  %s586 = scalar_lea.vmem %s1, 144
  %v587 = vld [vmem:[%s586] sm:$0xff]
  %588 = vst [vmem:[%s585] sm:$0xff] %v587
  %s589 = scalar_lea.vmem %s4, 152
  %s590 = scalar_lea.vmem %s1, 152
  %v591 = vld [vmem:[%s590] sm:$0xff]
  %592 = vst [vmem:[%s589] sm:$0xff] %v591
  %s593 = scalar_lea.vmem %s4, 160
  %s594 = scalar_lea.vmem %s1, 160
  %v595 = vld [vmem:[%s594] sm:$0xff]
  %596 = vst [vmem:[%s593] sm:$0xff] %v595
  %s597 = scalar_lea.vmem %s4, 168
  %s598 = scalar_lea.vmem %s1, 168
  %v599 = vld [vmem:[%s598] sm:$0xff]
  %600 = vst [vmem:[%s597] sm:$0xff] %v599
  %s601 = scalar_lea.vmem %s4, 176
  %s602 = scalar_lea.vmem %s1, 176
  %v603 = vld [vmem:[%s602] sm:$0xff]
  %604 = vst [vmem:[%s601] sm:$0xff] %v603
  %s605 = scalar_lea.vmem %s4, 184
  %s606 = scalar_lea.vmem %s1, 184
  %v607 = vld [vmem:[%s606] sm:$0xff]
  %608 = vst [vmem:[%s605] sm:$0xff] %v607
  %s609 = scalar_lea.vmem %s4, 192
  %s610 = scalar_lea.vmem %s1, 192
  %v611 = vld [vmem:[%s610] sm:$0xff]
  %612 = vst [vmem:[%s609] sm:$0xff] %v611
  %s613 = scalar_lea.vmem %s4, 200
  %s614 = scalar_lea.vmem %s1, 200
  %v615 = vld [vmem:[%s614] sm:$0xff]
  %616 = vst [vmem:[%s613] sm:$0xff] %v615
  %s617 = scalar_lea.vmem %s4, 208
  %s618 = scalar_lea.vmem %s1, 208
  %v619 = vld [vmem:[%s618] sm:$0xff]
  %620 = vst [vmem:[%s617] sm:$0xff] %v619
  %s621 = scalar_lea.vmem %s4, 216
  %s622 = scalar_lea.vmem %s1, 216
  %v623 = vld [vmem:[%s622] sm:$0xff]
  %624 = vst [vmem:[%s621] sm:$0xff] %v623
  %s625 = scalar_lea.vmem %s4, 224
  %s626 = scalar_lea.vmem %s1, 224
  %v627 = vld [vmem:[%s626] sm:$0xff]
  %628 = vst [vmem:[%s625] sm:$0xff] %v627
  %s629 = scalar_lea.vmem %s4, 232
  %s630 = scalar_lea.vmem %s1, 232
  %v631 = vld [vmem:[%s630] sm:$0xff]
  %632 = vst [vmem:[%s629] sm:$0xff] %v631
  %s633 = scalar_lea.vmem %s4, 240
  %s634 = scalar_lea.vmem %s1, 240
  %v635 = vld [vmem:[%s634] sm:$0xff]
  %636 = vst [vmem:[%s633] sm:$0xff] %v635
  %s637 = scalar_lea.vmem %s4, 248
  %s638 = scalar_lea.vmem %s1, 248
  %v639 = vld [vmem:[%s638] sm:$0xff]
  %640 = vst [vmem:[%s637] sm:$0xff] %v639
  %s641 = scalar_lea.vmem %s4, 256
  %s642 = scalar_lea.vmem %s1, 256
  %v643 = vld [vmem:[%s642] sm:$0xff]
  %644 = vst [vmem:[%s641] sm:$0xff] %v643
  %s645 = scalar_lea.vmem %s4, 264
  %s646 = scalar_lea.vmem %s1, 264
  %v647 = vld [vmem:[%s646] sm:$0xff]
  %648 = vst [vmem:[%s645] sm:$0xff] %v647
  %s649 = scalar_lea.vmem %s4, 272
  %s650 = scalar_lea.vmem %s1, 272
  %v651 = vld [vmem:[%s650] sm:$0xff]
  %652 = vst [vmem:[%s649] sm:$0xff] %v651
  %s653 = scalar_lea.vmem %s4, 280
  %s654 = scalar_lea.vmem %s1, 280
  %v655 = vld [vmem:[%s654] sm:$0xff]
  %656 = vst [vmem:[%s653] sm:$0xff] %v655
  %s657 = scalar_lea.vmem %s4, 288
  %s658 = scalar_lea.vmem %s1, 288
  %v659 = vld [vmem:[%s658] sm:$0xff]
  %660 = vst [vmem:[%s657] sm:$0xff] %v659
  %s661 = scalar_lea.vmem %s4, 296
  %s662 = scalar_lea.vmem %s1, 296
  %v663 = vld [vmem:[%s662] sm:$0xff]
  %664 = vst [vmem:[%s661] sm:$0xff] %v663
  %s665 = scalar_lea.vmem %s4, 304
  %s666 = scalar_lea.vmem %s1, 304
  %v667 = vld [vmem:[%s666] sm:$0xff]
  %668 = vst [vmem:[%s665] sm:$0xff] %v667
  %s669 = scalar_lea.vmem %s4, 312
  %s670 = scalar_lea.vmem %s1, 312
  %v671 = vld [vmem:[%s670] sm:$0xff]
  %672 = vst [vmem:[%s669] sm:$0xff] %v671
  %s673 = scalar_lea.vmem %s4, 320
  %s674 = scalar_lea.vmem %s1, 320
  %v675 = vld [vmem:[%s674] sm:$0xff]
  %676 = vst [vmem:[%s673] sm:$0xff] %v675
  %s677 = scalar_lea.vmem %s4, 328
  %s678 = scalar_lea.vmem %s1, 328
  %v679 = vld [vmem:[%s678] sm:$0xff]
  %680 = vst [vmem:[%s677] sm:$0xff] %v679
  %s681 = scalar_lea.vmem %s4, 336
  %s682 = scalar_lea.vmem %s1, 336
  %v683 = vld [vmem:[%s682] sm:$0xff]
  %684 = vst [vmem:[%s681] sm:$0xff] %v683
  %s685 = scalar_lea.vmem %s4, 344
  %s686 = scalar_lea.vmem %s1, 344
  %v687 = vld [vmem:[%s686] sm:$0xff]
  %688 = vst [vmem:[%s685] sm:$0xff] %v687
  %s689 = scalar_lea.vmem %s4, 352
  %s690 = scalar_lea.vmem %s1, 352
  %v691 = vld [vmem:[%s690] sm:$0xff]
  %692 = vst [vmem:[%s689] sm:$0xff] %v691
  %s693 = scalar_lea.vmem %s4, 360
  %s694 = scalar_lea.vmem %s1, 360
  %v695 = vld [vmem:[%s694] sm:$0xff]
  %696 = vst [vmem:[%s693] sm:$0xff] %v695
  %s697 = scalar_lea.vmem %s4, 368
  %s698 = scalar_lea.vmem %s1, 368
  %v699 = vld [vmem:[%s698] sm:$0xff]
  %700 = vst [vmem:[%s697] sm:$0xff] %v699
  %s701 = scalar_lea.vmem %s4, 376
  %s702 = scalar_lea.vmem %s1, 376
  %v703 = vld [vmem:[%s702] sm:$0xff]
  %704 = vst [vmem:[%s701] sm:$0xff] %v703
  %s705 = scalar_lea.vmem %s4, 384
  %s706 = scalar_lea.vmem %s1, 384
  %v707 = vld [vmem:[%s706] sm:$0xff]
  %708 = vst [vmem:[%s705] sm:$0xff] %v707
  %s709 = scalar_lea.vmem %s4, 392
  %s710 = scalar_lea.vmem %s1, 392
  %v711 = vld [vmem:[%s710] sm:$0xff]
  %712 = vst [vmem:[%s709] sm:$0xff] %v711
  %s713 = scalar_lea.vmem %s4, 400
  %s714 = scalar_lea.vmem %s1, 400
  %v715 = vld [vmem:[%s714] sm:$0xff]
  %716 = vst [vmem:[%s713] sm:$0xff] %v715
  %s717 = scalar_lea.vmem %s4, 408
  %s718 = scalar_lea.vmem %s1, 408
  %v719 = vld [vmem:[%s718] sm:$0xff]
  %720 = vst [vmem:[%s717] sm:$0xff] %v719
  %s721 = scalar_lea.vmem %s4, 416
  %s722 = scalar_lea.vmem %s1, 416
  %v723 = vld [vmem:[%s722] sm:$0xff]
  %724 = vst [vmem:[%s721] sm:$0xff] %v723
  %s725 = scalar_lea.vmem %s4, 424
  %s726 = scalar_lea.vmem %s1, 424
  %v727 = vld [vmem:[%s726] sm:$0xff]
  %728 = vst [vmem:[%s725] sm:$0xff] %v727
  %s729 = scalar_lea.vmem %s4, 432
  %s730 = scalar_lea.vmem %s1, 432
  %v731 = vld [vmem:[%s730] sm:$0xff]
  %732 = vst [vmem:[%s729] sm:$0xff] %v731
  %s733 = scalar_lea.vmem %s4, 440
  %s734 = scalar_lea.vmem %s1, 440
  %v735 = vld [vmem:[%s734] sm:$0xff]
  %736 = vst [vmem:[%s733] sm:$0xff] %v735
  %s737 = scalar_lea.vmem %s4, 448
  %s738 = scalar_lea.vmem %s1, 448
  %v739 = vld [vmem:[%s738] sm:$0xff]
  %740 = vst [vmem:[%s737] sm:$0xff] %v739
  %s741 = scalar_lea.vmem %s4, 456
  %s742 = scalar_lea.vmem %s1, 456
  %v743 = vld [vmem:[%s742] sm:$0xff]
  %744 = vst [vmem:[%s741] sm:$0xff] %v743
  %s745 = scalar_lea.vmem %s4, 464
  %s746 = scalar_lea.vmem %s1, 464
  %v747 = vld [vmem:[%s746] sm:$0xff]
  %748 = vst [vmem:[%s745] sm:$0xff] %v747
  %s749 = scalar_lea.vmem %s4, 472
  %s750 = scalar_lea.vmem %s1, 472
  %v751 = vld [vmem:[%s750] sm:$0xff]
  %752 = vst [vmem:[%s749] sm:$0xff] %v751
  %s753 = scalar_lea.vmem %s4, 480
  %s754 = scalar_lea.vmem %s1, 480
  %v755 = vld [vmem:[%s754] sm:$0xff]
  %756 = vst [vmem:[%s753] sm:$0xff] %v755
  %s757 = scalar_lea.vmem %s4, 488
  %s758 = scalar_lea.vmem %s1, 488
  %v759 = vld [vmem:[%s758] sm:$0xff]
  %760 = vst [vmem:[%s757] sm:$0xff] %v759
  %s761 = scalar_lea.vmem %s4, 496
  %s762 = scalar_lea.vmem %s1, 496
  %v763 = vld [vmem:[%s762] sm:$0xff]
  %764 = vst [vmem:[%s761] sm:$0xff] %v763
  %s765 = scalar_lea.vmem %s4, 504
  %s766 = scalar_lea.vmem %s1, 504
  %v767 = vld [vmem:[%s766] sm:$0xff]
  %768 = vst [vmem:[%s765] sm:$0xff] %v767
  %s769 = scalar_lea.vmem %s4, 512
  %s770 = scalar_lea.vmem %s1, 512
  %v771 = vld [vmem:[%s770] sm:$0xff]
  %772 = vst [vmem:[%s769] sm:$0xff] %v771
  %s773 = scalar_lea.vmem %s4, 520
  %s774 = scalar_lea.vmem %s1, 520
  %v775 = vld [vmem:[%s774] sm:$0xff]
  %776 = vst [vmem:[%s773] sm:$0xff] %v775
  %s777 = scalar_lea.vmem %s4, 528
  %s778 = scalar_lea.vmem %s1, 528
  %v779 = vld [vmem:[%s778] sm:$0xff]
  %780 = vst [vmem:[%s777] sm:$0xff] %v779
  %s781 = scalar_lea.vmem %s4, 536
  %s782 = scalar_lea.vmem %s1, 536
  %v783 = vld [vmem:[%s782] sm:$0xff]
  %784 = vst [vmem:[%s781] sm:$0xff] %v783
  %s785 = scalar_lea.vmem %s4, 544
  %s786 = scalar_lea.vmem %s1, 544
  %v787 = vld [vmem:[%s786] sm:$0xff]
  %788 = vst [vmem:[%s785] sm:$0xff] %v787
  %s789 = scalar_lea.vmem %s4, 552
  %s790 = scalar_lea.vmem %s1, 552
  %v791 = vld [vmem:[%s790] sm:$0xff]
  %792 = vst [vmem:[%s789] sm:$0xff] %v791
  %s793 = scalar_lea.vmem %s4, 560
  %s794 = scalar_lea.vmem %s1, 560
  %v795 = vld [vmem:[%s794] sm:$0xff]
  %796 = vst [vmem:[%s793] sm:$0xff] %v795
  %s797 = scalar_lea.vmem %s4, 568
  %s798 = scalar_lea.vmem %s1, 568
  %v799 = vld [vmem:[%s798] sm:$0xff]
  %800 = vst [vmem:[%s797] sm:$0xff] %v799
  %s801 = scalar_lea.vmem %s4, 576
  %s802 = scalar_lea.vmem %s1, 576
  %v803 = vld [vmem:[%s802] sm:$0xff]
  %804 = vst [vmem:[%s801] sm:$0xff] %v803
  %s805 = scalar_lea.vmem %s4, 584
  %s806 = scalar_lea.vmem %s1, 584
  %v807 = vld [vmem:[%s806] sm:$0xff]
  %808 = vst [vmem:[%s805] sm:$0xff] %v807
  %s809 = scalar_lea.vmem %s4, 592
  %s810 = scalar_lea.vmem %s1, 592
  %v811 = vld [vmem:[%s810] sm:$0xff]
  %812 = vst [vmem:[%s809] sm:$0xff] %v811
  %s813 = scalar_lea.vmem %s4, 600
  %s814 = scalar_lea.vmem %s1, 600
  %v815 = vld [vmem:[%s814] sm:$0xff]
  %816 = vst [vmem:[%s813] sm:$0xff] %v815
  %s817 = scalar_lea.vmem %s4, 608
  %s818 = scalar_lea.vmem %s1, 608
  %v819 = vld [vmem:[%s818] sm:$0xff]
  %820 = vst [vmem:[%s817] sm:$0xff] %v819
  %s821 = scalar_lea.vmem %s4, 616
  %s822 = scalar_lea.vmem %s1, 616
  %v823 = vld [vmem:[%s822] sm:$0xff]
  %824 = vst [vmem:[%s821] sm:$0xff] %v823
  %s825 = scalar_lea.vmem %s4, 624
  %s826 = scalar_lea.vmem %s1, 624
  %v827 = vld [vmem:[%s826] sm:$0xff]
  %828 = vst [vmem:[%s825] sm:$0xff] %v827
  %s829 = scalar_lea.vmem %s4, 632
  %s830 = scalar_lea.vmem %s1, 632
  %v831 = vld [vmem:[%s830] sm:$0xff]
  %832 = vst [vmem:[%s829] sm:$0xff] %v831
  %s833 = scalar_lea.vmem %s4, 640
  %s834 = scalar_lea.vmem %s1, 640
  %v835 = vld [vmem:[%s834] sm:$0xff]
  %836 = vst [vmem:[%s833] sm:$0xff] %v835
  %s837 = scalar_lea.vmem %s4, 648
  %s838 = scalar_lea.vmem %s1, 648
  %v839 = vld [vmem:[%s838] sm:$0xff]
  %840 = vst [vmem:[%s837] sm:$0xff] %v839
  %s841 = scalar_lea.vmem %s4, 656
  %s842 = scalar_lea.vmem %s1, 656
  %v843 = vld [vmem:[%s842] sm:$0xff]
  %844 = vst [vmem:[%s841] sm:$0xff] %v843
  %s845 = scalar_lea.vmem %s4, 664
  %s846 = scalar_lea.vmem %s1, 664
  %v847 = vld [vmem:[%s846] sm:$0xff]
  %848 = vst [vmem:[%s845] sm:$0xff] %v847
  %s849 = scalar_lea.vmem %s4, 672
  %s850 = scalar_lea.vmem %s1, 672
  %v851 = vld [vmem:[%s850] sm:$0xff]
  %852 = vst [vmem:[%s849] sm:$0xff] %v851
  %s853 = scalar_lea.vmem %s4, 680
  %s854 = scalar_lea.vmem %s1, 680
  %v855 = vld [vmem:[%s854] sm:$0xff]
  %856 = vst [vmem:[%s853] sm:$0xff] %v855
  %s857 = scalar_lea.vmem %s4, 688
  %s858 = scalar_lea.vmem %s1, 688
  %v859 = vld [vmem:[%s858] sm:$0xff]
  %860 = vst [vmem:[%s857] sm:$0xff] %v859
  %s861 = scalar_lea.vmem %s4, 696
  %s862 = scalar_lea.vmem %s1, 696
  %v863 = vld [vmem:[%s862] sm:$0xff]
  %864 = vst [vmem:[%s861] sm:$0xff] %v863
  %s865 = scalar_lea.vmem %s4, 704
  %s866 = scalar_lea.vmem %s1, 704
  %v867 = vld [vmem:[%s866] sm:$0xff]
  %868 = vst [vmem:[%s865] sm:$0xff] %v867
  %s869 = scalar_lea.vmem %s4, 712
  %s870 = scalar_lea.vmem %s1, 712
  %v871 = vld [vmem:[%s870] sm:$0xff]
  %872 = vst [vmem:[%s869] sm:$0xff] %v871
  %s873 = scalar_lea.vmem %s4, 720
  %s874 = scalar_lea.vmem %s1, 720
  %v875 = vld [vmem:[%s874] sm:$0xff]
  %876 = vst [vmem:[%s873] sm:$0xff] %v875
  %s877 = scalar_lea.vmem %s4, 728
  %s878 = scalar_lea.vmem %s1, 728
  %v879 = vld [vmem:[%s878] sm:$0xff]
  %880 = vst [vmem:[%s877] sm:$0xff] %v879
  %s881 = scalar_lea.vmem %s4, 736
  %s882 = scalar_lea.vmem %s1, 736
  %v883 = vld [vmem:[%s882] sm:$0xff]
  %884 = vst [vmem:[%s881] sm:$0xff] %v883
  %s885 = scalar_lea.vmem %s4, 744
  %s886 = scalar_lea.vmem %s1, 744
  %v887 = vld [vmem:[%s886] sm:$0xff]
  %888 = vst [vmem:[%s885] sm:$0xff] %v887
  %s889 = scalar_lea.vmem %s4, 752
  %s890 = scalar_lea.vmem %s1, 752
  %v891 = vld [vmem:[%s890] sm:$0xff]
  %892 = vst [vmem:[%s889] sm:$0xff] %v891
  %s893 = scalar_lea.vmem %s4, 760
  %s894 = scalar_lea.vmem %s1, 760
  %v895 = vld [vmem:[%s894] sm:$0xff]
  %896 = vst [vmem:[%s893] sm:$0xff] %v895
  %s897 = scalar_lea.vmem %s4, 768
  %s898 = scalar_lea.vmem %s1, 768
  %v899 = vld [vmem:[%s898] sm:$0xff]
  %900 = vst [vmem:[%s897] sm:$0xff] %v899
  %s901 = scalar_lea.vmem %s4, 776
  %s902 = scalar_lea.vmem %s1, 776
  %v903 = vld [vmem:[%s902] sm:$0xff]
  %904 = vst [vmem:[%s901] sm:$0xff] %v903
  %s905 = scalar_lea.vmem %s4, 784
  %s906 = scalar_lea.vmem %s1, 784
  %v907 = vld [vmem:[%s906] sm:$0xff]
  %908 = vst [vmem:[%s905] sm:$0xff] %v907
  %s909 = scalar_lea.vmem %s4, 792
  %s910 = scalar_lea.vmem %s1, 792
  %v911 = vld [vmem:[%s910] sm:$0xff]
  %912 = vst [vmem:[%s909] sm:$0xff] %v911
  %s913 = scalar_lea.vmem %s4, 800
  %s914 = scalar_lea.vmem %s1, 800
  %v915 = vld [vmem:[%s914] sm:$0xff]
  %916 = vst [vmem:[%s913] sm:$0xff] %v915
  %s917 = scalar_lea.vmem %s4, 808
  %s918 = scalar_lea.vmem %s1, 808
  %v919 = vld [vmem:[%s918] sm:$0xff]
  %920 = vst [vmem:[%s917] sm:$0xff] %v919
  %s921 = scalar_lea.vmem %s4, 816
  %s922 = scalar_lea.vmem %s1, 816
  %v923 = vld [vmem:[%s922] sm:$0xff]
  %924 = vst [vmem:[%s921] sm:$0xff] %v923
  %s925 = scalar_lea.vmem %s4, 824
  %s926 = scalar_lea.vmem %s1, 824
  %v927 = vld [vmem:[%s926] sm:$0xff]
  %928 = vst [vmem:[%s925] sm:$0xff] %v927
  %s929 = scalar_lea.vmem %s4, 832
  %s930 = scalar_lea.vmem %s1, 832
  %v931 = vld [vmem:[%s930] sm:$0xff]
  %932 = vst [vmem:[%s929] sm:$0xff] %v931
  %s933 = scalar_lea.vmem %s4, 840
  %s934 = scalar_lea.vmem %s1, 840
  %v935 = vld [vmem:[%s934] sm:$0xff]
  %936 = vst [vmem:[%s933] sm:$0xff] %v935
  %s937 = scalar_lea.vmem %s4, 848
  %s938 = scalar_lea.vmem %s1, 848
  %v939 = vld [vmem:[%s938] sm:$0xff]
  %940 = vst [vmem:[%s937] sm:$0xff] %v939
  %s941 = scalar_lea.vmem %s4, 856
  %s942 = scalar_lea.vmem %s1, 856
  %v943 = vld [vmem:[%s942] sm:$0xff]
  %944 = vst [vmem:[%s941] sm:$0xff] %v943
  %s945 = scalar_lea.vmem %s4, 864
  %s946 = scalar_lea.vmem %s1, 864
  %v947 = vld [vmem:[%s946] sm:$0xff]
  %948 = vst [vmem:[%s945] sm:$0xff] %v947
  %s949 = scalar_lea.vmem %s4, 872
  %s950 = scalar_lea.vmem %s1, 872
  %v951 = vld [vmem:[%s950] sm:$0xff]
  %952 = vst [vmem:[%s949] sm:$0xff] %v951
  %s953 = scalar_lea.vmem %s4, 880
  %s954 = scalar_lea.vmem %s1, 880
  %v955 = vld [vmem:[%s954] sm:$0xff]
  %956 = vst [vmem:[%s953] sm:$0xff] %v955
  %s957 = scalar_lea.vmem %s4, 888
  %s958 = scalar_lea.vmem %s1, 888
  %v959 = vld [vmem:[%s958] sm:$0xff]
  %960 = vst [vmem:[%s957] sm:$0xff] %v959
  %s961 = scalar_lea.vmem %s4, 896
  %s962 = scalar_lea.vmem %s1, 896
  %v963 = vld [vmem:[%s962] sm:$0xff]
  %964 = vst [vmem:[%s961] sm:$0xff] %v963
  %s965 = scalar_lea.vmem %s4, 904
  %s966 = scalar_lea.vmem %s1, 904
  %v967 = vld [vmem:[%s966] sm:$0xff]
  %968 = vst [vmem:[%s965] sm:$0xff] %v967
  %s969 = scalar_lea.vmem %s4, 912
  %s970 = scalar_lea.vmem %s1, 912
  %v971 = vld [vmem:[%s970] sm:$0xff]
  %972 = vst [vmem:[%s969] sm:$0xff] %v971
  %s973 = scalar_lea.vmem %s4, 920
  %s974 = scalar_lea.vmem %s1, 920
  %v975 = vld [vmem:[%s974] sm:$0xff]
  %976 = vst [vmem:[%s973] sm:$0xff] %v975
  %s977 = scalar_lea.vmem %s4, 928
  %s978 = scalar_lea.vmem %s1, 928
  %v979 = vld [vmem:[%s978] sm:$0xff]
  %980 = vst [vmem:[%s977] sm:$0xff] %v979
  %s981 = scalar_lea.vmem %s4, 936
  %s982 = scalar_lea.vmem %s1, 936
  %v983 = vld [vmem:[%s982] sm:$0xff]
  %984 = vst [vmem:[%s981] sm:$0xff] %v983
  %s985 = scalar_lea.vmem %s4, 944
  %s986 = scalar_lea.vmem %s1, 944
  %v987 = vld [vmem:[%s986] sm:$0xff]
  %988 = vst [vmem:[%s985] sm:$0xff] %v987
  %s989 = scalar_lea.vmem %s4, 952
  %s990 = scalar_lea.vmem %s1, 952
  %v991 = vld [vmem:[%s990] sm:$0xff]
  %992 = vst [vmem:[%s989] sm:$0xff] %v991
  %s993 = scalar_lea.vmem %s4, 960
  %s994 = scalar_lea.vmem %s1, 960
  %v995 = vld [vmem:[%s994] sm:$0xff]
  %996 = vst [vmem:[%s993] sm:$0xff] %v995
  %s997 = scalar_lea.vmem %s4, 968
  %s998 = scalar_lea.vmem %s1, 968
  %v999 = vld [vmem:[%s998] sm:$0xff]
  %1000 = vst [vmem:[%s997] sm:$0xff] %v999
  %s1001 = scalar_lea.vmem %s4, 976
  %s1002 = scalar_lea.vmem %s1, 976
  %v1003 = vld [vmem:[%s1002] sm:$0xff]
  %1004 = vst [vmem:[%s1001] sm:$0xff] %v1003
  %s1005 = scalar_lea.vmem %s4, 984
  %s1006 = scalar_lea.vmem %s1, 984
  %v1007 = vld [vmem:[%s1006] sm:$0xff]
  %1008 = vst [vmem:[%s1005] sm:$0xff] %v1007
  %s1009 = scalar_lea.vmem %s4, 992
  %s1010 = scalar_lea.vmem %s1, 992
  %v1011 = vld [vmem:[%s1010] sm:$0xff]
  %1012 = vst [vmem:[%s1009] sm:$0xff] %v1011
  %s1013 = scalar_lea.vmem %s4, 1000
  %s1014 = scalar_lea.vmem %s1, 1000
  %v1015 = vld [vmem:[%s1014] sm:$0xff]
  %1016 = vst [vmem:[%s1013] sm:$0xff] %v1015
  %s1017 = scalar_lea.vmem %s4, 1008
  %s1018 = scalar_lea.vmem %s1, 1008
  %v1019 = vld [vmem:[%s1018] sm:$0xff]
  %1020 = vst [vmem:[%s1017] sm:$0xff] %v1019
  %s1021 = scalar_lea.vmem %s4, 1016
  %s1022 = scalar_lea.vmem %s1, 1016
  %v1023 = vld [vmem:[%s1022] sm:$0xff]
  %1024 = vst [vmem:[%s1021] sm:$0xff] %v1023

</llo_original>
